<compile_context>
chip_gen: v7x
topology: tpu7x:2x2x1
jax: 0.10.0
libtpu: 0.0.40
codegen_flags: <defaults>
</compile_context>

<pallas_src>
import jax
import jax.numpy as jnp
from jax.experimental import pallas as pl
from jax.experimental.pallas import tpu as pltpu

# ---- MoCo hyper-parameters (small, TPU-tile-friendly) -----------------------
DIM = 128           # feature dimension
R = 256             # queue size (must be a multiple of batch)
M_MOMENTUM = 0.999  # key-encoder momentum
TEMP = 0.1          # softmax temperature
EPS = 1e-12         # torch.nn.functional.normalize eps
LANE = 128          # lane-dense padding width for the l_pos column


# ---------------------------------------------------------------------------
# Fused kernel: momentum EMA + key/query encode (one MXU pass) + normalize + logits
# ---------------------------------------------------------------------------
def _moco_fused_kernel(imq_ref, imk_ref, wq_ref, bq_ref, wk_ref, bk_ref,
                       queue_ref,
                       wk_out_ref, bk_out_ref, k_out_ref, logits_ref):
    n = imq_ref.shape[0]
    d = wq_ref.shape[1]
    one_minus_m = 1.0 - M_MOMENTUM

    # ---- momentum EMA of key-encoder params (f32 on the VPU) ----
    # Single store stream (on v5e the 1 vst slot is the saturated unit; the
    # MXU pass below hides underneath it). No extra temporaries / re-reads.
    wk_new = wk_ref[...] * M_MOMENTUM + wq_ref[...] * one_minus_m
    bk_new = bk_ref[...] * M_MOMENTUM + bq_ref[...] * one_minus_m
    wk_out_ref[...] = wk_new
    bk_out_ref[...] = bk_new

    # ---- one fused MXU pass for query + key encoders ----
    # LHS (2N, F) bf16, RHS (F, 2*DIM) bf16, f32 accumulate.
    x = jnp.concatenate([imq_ref[...], imk_ref[...]], axis=0).astype(jnp.bfloat16)
    w = jnp.concatenate([wq_ref[...].astype(jnp.bfloat16),
                         wk_new.astype(jnp.bfloat16)], axis=1)
    y = jnp.dot(x, w, preferred_element_type=jnp.float32)      # (2N, 2*DIM) f32

    yq = y[:n, :d] + bq_ref[...]          # query half: rows [0,N), cols [0,D)
    yk = y[n:, d:] + bk_new               # key half:  rows [N,2N), cols [D,2D)

    # ---- L2 normalize in f32 (rsqrt on the EUP); clamp matches F.normalize ----
    inv_nq = jax.lax.rsqrt(jnp.maximum(
        jnp.sum(yq * yq, axis=1, keepdims=True), EPS * EPS))
    inv_nk = jax.lax.rsqrt(jnp.maximum(
        jnp.sum(yk * yk, axis=1, keepdims=True), EPS * EPS))
    q = yq * inv_nq
    k = yk * inv_nk
    k_out_ref[...] = k

    # ---- contrastive logits (1/T in-kernel), single lane-dense output ----
    inv_t = 1.0 / TEMP
    pos = jnp.sum(q * k, axis=1, keepdims=True) * inv_t         # (N, 1)
    logits_ref[:, :LANE] = jnp.broadcast_to(pos, (n, LANE))     # unmasked vst
    # queue stored (R, DIM): contract dim 1 of both operands (RHS transpose
    # rides the otherwise-idle XLU); bf16 inputs, f32 accumulate.
    neg = jax.lax.dot_general(
        q.astype(jnp.bfloat16), queue_ref[...].astype(jnp.bfloat16),
        dimension_numbers=(((1,), (1,)), ((), ())),
        preferred_element_type=jnp.float32) * inv_t              # (N, R)
    logits_ref[:, LANE:] = neg


# ---------------------------------------------------------------------------
# MoCo forward (training path, cluster_result=None)
# ---------------------------------------------------------------------------
def moco_forward(params_q, params_k, queue, queue_ptr, im_q, im_k):
    n = im_q.shape[0]
    assert R % n == 0  # mirrors the PyTorch _dequeue_and_enqueue assert

    imq_flat = im_q.reshape(n, -1)
    imk_flat = im_k.reshape(n, -1)
    f = imq_flat.shape[1]
    d = params_q["w"].shape[1]
    r = queue.shape[0]             # queue is stored (R, DIM)

    def full(shape):
        return pl.BlockSpec(shape, lambda i: (0,) * len(shape))

    wk_new, bk_new, k_feat, logits_pad = pl.pallas_call(
        _moco_fused_kernel,
        grid=(1,),
        out_shape=(
            jax.ShapeDtypeStruct((f, d), jnp.float32),        # new w_k
            jax.ShapeDtypeStruct((1, d), jnp.float32),        # new b_k
            jax.ShapeDtypeStruct((n, d), jnp.float32),        # key features
            jax.ShapeDtypeStruct((n, LANE + r), jnp.float32),  # [pos | neg]
        ),
        in_specs=[full((n, f)), full((n, f)),
                  full((f, d)), full((1, d)),
                  full((f, d)), full((1, d)),
                  full((r, d))],
        out_specs=(full((f, d)), full((1, d)), full((n, d)),
                   full((n, LANE + r))),
        # in-place EMA: alias key-encoder params onto their outputs
        input_output_aliases={4: 0, 5: 1},
        compiler_params=pltpu.CompilerParams(
            dimension_semantics=("arbitrary",)),
    )(imq_flat, imk_flat, params_q["w"], params_q["b"],
      params_k["w"], params_k["b"], queue)

    # column LANE-1 holds l_pos (broadcast), columns [LANE, LANE+R) hold l_neg.
    logits = logits_pad[:, LANE - 1:]                       # (N, 1+R), /T done
    labels = jnp.zeros((n,), dtype=jnp.int32)
    params_k_new = {"w": wk_new, "b": bk_new}

    # --- dequeue and enqueue: sublane-aligned row update of the (R, DIM) queue ---
    ptr = queue_ptr[0]
    queue = jax.lax.dynamic_update_slice(queue, k_feat, (ptr, 0))
    queue_ptr = queue_ptr.at[0].set((ptr + n) % R)

    return logits, labels, None, None, params_k_new, queue, queue_ptr


# params_k / queue / queue_ptr are donated so the EMA writeback and the queue
# update happen in place (no defensive copies before the custom call).
moco_forward_jit = jax.jit(moco_forward, donate_argnums=(1, 2, 3))


# ---------------------------------------------------------------------------
# Pure-JAX f32 reference (tolerance check for the bf16-MXU kernel path)
# ---------------------------------------------------------------------------
def _reference(params_q, params_k, queue, im_q, im_k):
    n = im_q.shape[0]
    xq = im_q.reshape(n, -1)
    xk = im_k.reshape(n, -1)
    wk = params_k["w"] * M_MOMENTUM + params_q["w"] * (1.0 - M_MOMENTUM)
    bk = params_k["b"] * M_MOMENTUM + params_q["b"] * (1.0 - M_MOMENTUM)

    def enc(x, w, b):
        y = jnp.dot(x, w, precision=jax.lax.Precision.HIGHEST) + b
        nrm = jnp.maximum(jnp.sqrt(jnp.sum(y * y, axis=1, keepdims=True)), EPS)
        return y / nrm

    q = enc(xq, params_q["w"], params_q["b"])
    k = enc(xk, wk, bk)
    pos = jnp.sum(q * k, axis=1, keepdims=True)
    neg = jnp.dot(q, queue.T, precision=jax.lax.Precision.HIGHEST)
    logits = jnp.concatenate([pos, neg], axis=1) / TEMP
    return logits, wk


# ---------------------------------------------------------------------------
if __name__ == "__main__":
    key = jax.random.PRNGKey(0)
    k_wq, k_b, k_queue, k_imq, k_imk = jax.random.split(key, 5)

    # small image shapes consistent with the module's NCHW conv inputs
    N, C, H, W = 8, 4, 16, 16
    F = C * H * W  # 1024

    # deterministic synthetic encoder params; key encoder starts as a *distinct
    # copy* of the query encoder (param_k.data.copy_(param_q.data)) — it must
    # not share buffers with params_q because params_k is donated and written
    # in place via input_output_aliases.
    w_q = jax.random.normal(k_wq, (F, DIM), dtype=jnp.float32) * 0.02
    b_q = jax.random.normal(k_b, (1, DIM), dtype=jnp.float32) * 0.01
    params_q = {"w": w_q, "b": b_q}
    params_k = {"w": jnp.copy(w_q), "b": jnp.copy(b_q)}

    # queue: stored transposed as (R, DIM) with L2-normalized rows — same
    # semantics as the PyTorch normalize(randn(dim, r), dim=0) buffer, but the
    # enqueue is a sublane-aligned row update and l_neg contracts dim 1.
    queue = jax.random.normal(k_queue, (R, DIM), dtype=jnp.float32)
    queue = queue / jnp.maximum(
        jnp.sqrt(jnp.sum(queue * queue, axis=1, keepdims=True)), EPS)
    queue_ptr = jnp.zeros((1,), dtype=jnp.int32)

    im_q = jax.random.normal(k_imq, (N, C, H, W), dtype=jnp.float32)
    im_k = jax.random.normal(k_imk, (N, C, H, W), dtype=jnp.float32)

    # reference computed BEFORE the donating call (donation invalidates inputs)
    ref_logits, ref_wk = _reference(params_q, params_k, queue, im_q, im_k)
    jax.block_until_ready((ref_logits, ref_wk))

    logits, labels, _, _, params_k, queue, queue_ptr = moco_forward_jit(
        params_q, params_k, queue, queue_ptr, im_q, im_k)
    jax.block_until_ready((logits, labels, params_k, queue, queue_ptr))

    assert logits.shape == (N, 1 + R)
    assert labels.shape == (N,)
    assert params_k["w"].shape == (F, DIM)
    assert queue.shape == (R, DIM)
    assert int(queue_ptr[0]) == N
    # bf16 MXU vs f32 reference (contrastive logits); EMA is exact f32
    assert jnp.allclose(logits, ref_logits, rtol=0.05, atol=0.08)
    assert jnp.allclose(params_k["w"], ref_wk, rtol=1e-5, atol=1e-6)
    print("KERNEL_OK")
</pallas_src>

<mosaic_0001>
module attributes {stable_mosaic.version = 11 : i64} {
  func.func @_moco_fused_kernel(%arg0: i32, %arg1: memref<8x1024xf32, #tpu.memory_space<vmem>>, %arg2: memref<8x1024xf32, #tpu.memory_space<vmem>>, %arg3: memref<1024x128xf32, #tpu.memory_space<vmem>>, %arg4: memref<1x128xf32, #tpu.memory_space<vmem>>, %arg5: memref<1024x128xf32, #tpu.memory_space<vmem>>, %arg6: memref<1x128xf32, #tpu.memory_space<vmem>>, %arg7: memref<256x128xf32, #tpu.memory_space<vmem>>, %arg8: memref<1024x128xf32, #tpu.memory_space<vmem>>, %arg9: memref<1x128xf32, #tpu.memory_space<vmem>>, %arg10: memref<8x128xf32, #tpu.memory_space<vmem>>, %arg11: memref<8x384xf32, #tpu.memory_space<vmem>>) attributes {dimension_semantics = [#tpu.dimension_semantics<arbitrary>], iteration_bounds = array<i64: 1>, scalar_prefetch = 0 : i64, scratch_operands = 0 : i64, tpu.core_type = #tpu.core_type<tc>, window_params = [{pipeline_mode = #tpu.pipeline_mode<synchronous>, transform_indices = @transform_0, window_bounds = array<i64: 8, 1024>}, {pipeline_mode = #tpu.pipeline_mode<synchronous>, transform_indices = @transform_1, window_bounds = array<i64: 8, 1024>}, {pipeline_mode = #tpu.pipeline_mode<synchronous>, transform_indices = @transform_2, window_bounds = array<i64: 1024, 128>}, {pipeline_mode = #tpu.pipeline_mode<synchronous>, transform_indices = @transform_3, window_bounds = array<i64: 1, 128>}, {pipeline_mode = #tpu.pipeline_mode<synchronous>, transform_indices = @transform_4, window_bounds = array<i64: 1024, 128>}, {pipeline_mode = #tpu.pipeline_mode<synchronous>, transform_indices = @transform_5, window_bounds = array<i64: 1, 128>}, {pipeline_mode = #tpu.pipeline_mode<synchronous>, transform_indices = @transform_6, window_bounds = array<i64: 256, 128>}, {pipeline_mode = #tpu.pipeline_mode<synchronous>, transform_indices = @transform_7, window_bounds = array<i64: 1024, 128>}, {pipeline_mode = #tpu.pipeline_mode<synchronous>, transform_indices = @transform_8, window_bounds = array<i64: 1, 128>}, {pipeline_mode = #tpu.pipeline_mode<synchronous>, transform_indices = @transform_9, window_bounds = array<i64: 8, 128>}, {pipeline_mode = #tpu.pipeline_mode<synchronous>, transform_indices = @transform_10, window_bounds = array<i64: 8, 384>}]} {
    %c0 = arith.constant 0 : index
    %c0_0 = arith.constant 0 : index
    %0 = vector.load %arg5[%c0, %c0_0] : memref<1024x128xf32, #tpu.memory_space<vmem>>, vector<1024x128xf32>
    %cst = arith.constant 9.990000e-01 : f32
    %1 = vector.broadcast %cst : f32 to vector<1024x128xf32>
    %2 = arith.mulf %0, %1 : vector<1024x128xf32>
    %c0_1 = arith.constant 0 : index
    %c0_2 = arith.constant 0 : index
    %3 = vector.load %arg3[%c0_1, %c0_2] : memref<1024x128xf32, #tpu.memory_space<vmem>>, vector<1024x128xf32>
    %cst_3 = arith.constant 1.000000e-03 : f32
    %4 = vector.broadcast %cst_3 : f32 to vector<1024x128xf32>
    %5 = arith.mulf %3, %4 : vector<1024x128xf32>
    %6 = arith.addf %2, %5 : vector<1024x128xf32>
    %c0_4 = arith.constant 0 : index
    %c0_5 = arith.constant 0 : index
    %7 = vector.load %arg6[%c0_4, %c0_5] : memref<1x128xf32, #tpu.memory_space<vmem>>, vector<1x128xf32>
    %cst_6 = arith.constant 9.990000e-01 : f32
    %8 = vector.broadcast %cst_6 : f32 to vector<1x128xf32>
    %9 = arith.mulf %7, %8 : vector<1x128xf32>
    %c0_7 = arith.constant 0 : index
    %c0_8 = arith.constant 0 : index
    %10 = vector.load %arg4[%c0_7, %c0_8] : memref<1x128xf32, #tpu.memory_space<vmem>>, vector<1x128xf32>
    %cst_9 = arith.constant 1.000000e-03 : f32
    %11 = vector.broadcast %cst_9 : f32 to vector<1x128xf32>
    %12 = arith.mulf %10, %11 : vector<1x128xf32>
    %13 = arith.addf %9, %12 : vector<1x128xf32>
    %c0_10 = arith.constant 0 : index
    %c0_11 = arith.constant 0 : index
    %14 = vector.load %arg8[%c0_10, %c0_11] : memref<1024x128xf32, #tpu.memory_space<vmem>>, vector<1024x128xf32>
    tpu.vector_store %arg8[%c0_10, %c0_11], %6 {strides = array<i32>} : memref<1024x128xf32, #tpu.memory_space<vmem>>, vector<1024x128xf32>,
    %c0_12 = arith.constant 0 : index
    %c0_13 = arith.constant 0 : index
    %15 = vector.load %arg9[%c0_12, %c0_13] : memref<1x128xf32, #tpu.memory_space<vmem>>, vector<1x128xf32>
    tpu.vector_store %arg9[%c0_12, %c0_13], %13 {strides = array<i32>} : memref<1x128xf32, #tpu.memory_space<vmem>>, vector<1x128xf32>,
    %c0_14 = arith.constant 0 : index
    %c0_15 = arith.constant 0 : index
    %16 = vector.load %arg1[%c0_14, %c0_15] : memref<8x1024xf32, #tpu.memory_space<vmem>>, vector<8x1024xf32>
    %c0_16 = arith.constant 0 : index
    %c0_17 = arith.constant 0 : index
    %17 = vector.load %arg2[%c0_16, %c0_17] : memref<8x1024xf32, #tpu.memory_space<vmem>>, vector<8x1024xf32>
    %18 = tpu.concatenate %16, %17 in 0 : vector<8x1024xf32>, vector<8x1024xf32> -> vector<16x1024xf32>
    %19 = arith.truncf %18 : vector<16x1024xf32> to vector<16x1024xbf16>
    %c0_18 = arith.constant 0 : index
    %c0_19 = arith.constant 0 : index
    %20 = vector.load %arg3[%c0_18, %c0_19] : memref<1024x128xf32, #tpu.memory_space<vmem>>, vector<1024x128xf32>
    %21 = arith.truncf %20 : vector<1024x128xf32> to vector<1024x128xbf16>
    %22 = arith.truncf %6 : vector<1024x128xf32> to vector<1024x128xbf16>
    %23 = tpu.concatenate %21, %22 in 1 : vector<1024x128xbf16>, vector<1024x128xbf16> -> vector<1024x256xbf16>
    %cst_20 = arith.constant dense<0.000000e+00> : vector<16x256xf32>
    %24 = tpu.matmul %19, %23, %cst_20 {dimension_numbers = #tpu.dot_dimension_numbers<[1], [0], [0], [1], [0, 0, 1, 1], [], []>} : vector<16x1024xbf16>, vector<1024x256xbf16>, vector<16x256xf32> -> vector<16x256xf32>
    %25 = vector.extract_strided_slice %24 {offsets = [0, 0], sizes = [8, 128], strides = [1, 1]} : vector<16x256xf32> to vector<8x128xf32>
    %c0_21 = arith.constant 0 : index
    %c0_22 = arith.constant 0 : index
    %26 = vector.load %arg4[%c0_21, %c0_22] : memref<1x128xf32, #tpu.memory_space<vmem>>, vector<1x128xf32>
    %27 = vector.broadcast %26 : vector<1x128xf32> to vector<8x128xf32>
    %28 = arith.addf %25, %27 : vector<8x128xf32>
    %29 = vector.extract_strided_slice %24 {offsets = [8, 128], sizes = [8, 128], strides = [1, 1]} : vector<16x256xf32> to vector<8x128xf32>
    %30 = vector.broadcast %13 : vector<1x128xf32> to vector<8x128xf32>
    %31 = arith.addf %29, %30 : vector<8x128xf32>
    %32 = arith.mulf %28, %28 : vector<8x128xf32>
    %cst_23 = arith.constant dense<0.000000e+00> : vector<8xf32>
    %33 = vector.multi_reduction <add>, %32, %cst_23 [1] : vector<8x128xf32> to vector<8xf32>
    %34 = vector.shape_cast %33 : vector<8xf32> to vector<8x1xf32>
    %cst_24 = arith.constant 1.000000e-24 : f32
    %35 = vector.broadcast %cst_24 : f32 to vector<8x1xf32>
    %36 = arith.maximumf %34, %35 : vector<8x1xf32>
    %37 = math.rsqrt %36 : vector<8x1xf32>
    %38 = arith.mulf %31, %31 : vector<8x128xf32>
    %cst_25 = arith.constant dense<0.000000e+00> : vector<8xf32>
    %39 = vector.multi_reduction <add>, %38, %cst_25 [1] : vector<8x128xf32> to vector<8xf32>
    %40 = vector.shape_cast %39 : vector<8xf32> to vector<8x1xf32>
    %cst_26 = arith.constant 1.000000e-24 : f32
    %41 = vector.broadcast %cst_26 : f32 to vector<8x1xf32>
    %42 = arith.maximumf %40, %41 : vector<8x1xf32>
    %43 = math.rsqrt %42 : vector<8x1xf32>
    %44 = vector.broadcast %37 : vector<8x1xf32> to vector<8x128xf32>
    %45 = arith.mulf %28, %44 : vector<8x128xf32>
    %46 = vector.broadcast %43 : vector<8x1xf32> to vector<8x128xf32>
    %47 = arith.mulf %31, %46 : vector<8x128xf32>
    %c0_27 = arith.constant 0 : index
    %c0_28 = arith.constant 0 : index
    %48 = vector.load %arg10[%c0_27, %c0_28] : memref<8x128xf32, #tpu.memory_space<vmem>>, vector<8x128xf32>
    tpu.vector_store %arg10[%c0_27, %c0_28], %47 {strides = array<i32>} : memref<8x128xf32, #tpu.memory_space<vmem>>, vector<8x128xf32>,
    %49 = arith.mulf %45, %47 : vector<8x128xf32>
    %cst_29 = arith.constant dense<0.000000e+00> : vector<8xf32>
    %50 = vector.multi_reduction <add>, %49, %cst_29 [1] : vector<8x128xf32> to vector<8xf32>
    %51 = vector.shape_cast %50 : vector<8xf32> to vector<8x1xf32>
    %cst_30 = arith.constant 1.000000e+01 : f32
    %52 = vector.broadcast %cst_30 : f32 to vector<8x1xf32>
    %53 = arith.mulf %51, %52 : vector<8x1xf32>
    %54 = vector.shape_cast %53 : vector<8x1xf32> to vector<8x1xf32>
    %55 = vector.broadcast %54 : vector<8x1xf32> to vector<8x128xf32>
    %c0_31 = arith.constant 0 : index
    %c0_32 = arith.constant 0 : index
    %56 = vector.load %arg11[%c0_31, %c0_32] : memref<8x384xf32, #tpu.memory_space<vmem>>, vector<8x128xf32>
    tpu.vector_store %arg11[%c0_31, %c0_32], %55 {strides = array<i32>} : memref<8x384xf32, #tpu.memory_space<vmem>>, vector<8x128xf32>,
    %57 = arith.truncf %45 : vector<8x128xf32> to vector<8x128xbf16>
    %c0_33 = arith.constant 0 : index
    %c0_34 = arith.constant 0 : index
    %58 = vector.load %arg7[%c0_33, %c0_34] : memref<256x128xf32, #tpu.memory_space<vmem>>, vector<256x128xf32>
    %59 = arith.truncf %58 : vector<256x128xf32> to vector<256x128xbf16>
    %cst_35 = arith.constant dense<0.000000e+00> : vector<8x256xf32>
    %60 = tpu.matmul %57, %59, %cst_35 {dimension_numbers = #tpu.dot_dimension_numbers<[1], [1], [0], [0], [0, 0, 1, 0], [], []>} : vector<8x128xbf16>, vector<256x128xbf16>, vector<8x256xf32> -> vector<8x256xf32>
    %cst_36 = arith.constant 1.000000e+01 : f32
    %61 = vector.broadcast %cst_36 : f32 to vector<8x256xf32>
    %62 = arith.mulf %60, %61 : vector<8x256xf32>
    %c0_37 = arith.constant 0 : index
    %c128 = arith.constant 128 : index
    %63 = vector.load %arg11[%c0_37, %c128] : memref<8x384xf32, #tpu.memory_space<vmem>>, vector<8x256xf32>
    tpu.vector_store %arg11[%c0_37, %c128], %62 {strides = array<i32>} : memref<8x384xf32, #tpu.memory_space<vmem>>, vector<8x256xf32>,
    return
  }
  func.func @transform_0(%arg0: i32) -> (i32, i32) {
    %c0_i32 = arith.constant 0 : i32
    %c0_i32_0 = arith.constant 0 : i32
    %c0_i32_1 = arith.constant 0 : i32
    return %c0_i32, %c0_i32_0 : i32, i32
  }
  func.func @transform_1(%arg0: i32) -> (i32, i32) {
    %c0_i32 = arith.constant 0 : i32
    %c0_i32_0 = arith.constant 0 : i32
    %c0_i32_1 = arith.constant 0 : i32
    return %c0_i32, %c0_i32_0 : i32, i32
  }
  func.func @transform_2(%arg0: i32) -> (i32, i32) {
    %c0_i32 = arith.constant 0 : i32
    %c0_i32_0 = arith.constant 0 : i32
    %c0_i32_1 = arith.constant 0 : i32
    return %c0_i32, %c0_i32_0 : i32, i32
  }
  func.func @transform_3(%arg0: i32) -> (i32, i32) {
    %c0_i32 = arith.constant 0 : i32
    %c0_i32_0 = arith.constant 0 : i32
    %c0_i32_1 = arith.constant 0 : i32
    return %c0_i32, %c0_i32_0 : i32, i32
  }
  func.func @transform_4(%arg0: i32) -> (i32, i32) {
    %c0_i32 = arith.constant 0 : i32
    %c0_i32_0 = arith.constant 0 : i32
    %c0_i32_1 = arith.constant 0 : i32
    return %c0_i32, %c0_i32_0 : i32, i32
  }
  func.func @transform_5(%arg0: i32) -> (i32, i32) {
    %c0_i32 = arith.constant 0 : i32
    %c0_i32_0 = arith.constant 0 : i32
    %c0_i32_1 = arith.constant 0 : i32
    return %c0_i32, %c0_i32_0 : i32, i32
  }
  func.func @transform_6(%arg0: i32) -> (i32, i32) {
    %c0_i32 = arith.constant 0 : i32
    %c0_i32_0 = arith.constant 0 : i32
    %c0_i32_1 = arith.constant 0 : i32
    return %c0_i32, %c0_i32_0 : i32, i32
  }
  func.func @transform_7(%arg0: i32) -> (i32, i32) {
    %c0_i32 = arith.constant 0 : i32
    %c0_i32_0 = arith.constant 0 : i32
    %c0_i32_1 = arith.constant 0 : i32
    return %c0_i32, %c0_i32_0 : i32, i32
  }
  func.func @transform_8(%arg0: i32) -> (i32, i32) {
    %c0_i32 = arith.constant 0 : i32
    %c0_i32_0 = arith.constant 0 : i32
    %c0_i32_1 = arith.constant 0 : i32
    return %c0_i32, %c0_i32_0 : i32, i32
  }
  func.func @transform_9(%arg0: i32) -> (i32, i32) {
    %c0_i32 = arith.constant 0 : i32
    %c0_i32_0 = arith.constant 0 : i32
    %c0_i32_1 = arith.constant 0 : i32
    return %c0_i32, %c0_i32_0 : i32, i32
  }
  func.func @transform_10(%arg0: i32) -> (i32, i32) {
    %c0_i32 = arith.constant 0 : i32
    %c0_i32_0 = arith.constant 0 : i32
    %c0_i32_1 = arith.constant 0 : i32
    return %c0_i32, %c0_i32_0 : i32, i32
  }
}

</mosaic_0001>

<llo_original>
// kernel: moco_forward.1
$region0: #{moco_forward.1}
  #allocation0 [shape = 'u32[]', space=smem, size = 0x4, offset = 0x4, fixed_abs, tag = 'smem constant byte address 0x4 - core index']
  #allocation1 [shape = 'u32[144,128]{1,0:T(1,128)}', space=vmem, size = 0x12000, scoped, tag = 'internal scratch']
  %s0 = inlined_call_operand.vmem [shape: f32[8,1024], index: 0, kind: input, shape index: {}]
  %s1 = inlined_call_operand.vmem [shape: f32[8,1024], index: 1, kind: input, shape index: {}]
  %s2 = inlined_call_operand.vmem [shape: f32[1024,128], index: 2, kind: input, shape index: {}]
  %s3 = inlined_call_operand.vmem [shape: f32[1,128], index: 3, kind: input, shape index: {}]
  %s4 = inlined_call_operand.hbm [shape: f32[1024,128], index: 4, kind: input, shape index: {}, may-alias: {4,7}]
  %s5 = inlined_call_operand.vmem [shape: f32[1,128], index: 5, kind: input, shape index: {}, may-alias: {5,8}]
  %s6 = inlined_call_operand.hbm [shape: f32[256,128], index: 6, kind: input, shape index: {}]
  %s7 = inlined_call_operand.hbm [shape: f32[1024,128], index: 7, kind: output, shape index: {0}, may-alias: {4,7}]
  %s8 = inlined_call_operand.vmem [shape: f32[1,128], index: 8, kind: output, shape index: {1}, may-alias: {5,8}]
  %s9 = inlined_call_operand.vmem [shape: f32[8,128], index: 9, kind: output, shape index: {2}]
  %s10 = inlined_call_operand.vmem [shape: f32[8,384], index: 10, kind: output, shape index: {3}]
  %11 = xla_tuple %s7, %s8, %s9, %s10
  %s12 = sld [smem:[#allocation0]]
  $region70: #{moco_forward.1} parent=0
    _
  %s14 = ssub.s32 1, %s12
  %s15 = scalar_select 0, %s14, %s12
  $region1: #{moco_forward.1} parent=0
    #allocation2 [shape = 'u8[524288]{0}', space=vmem, size = 0x80000, scoped, tag = 'input window, operand 4, single buffered']
    #allocation3 [shape = 's32[1]{0}', space=sflag, size = 0x4, scoped, tag = 'scoped memory for moco_forward.1']
    #allocation4 [shape = 's32[1]{0}', space=sflag, size = 0x4, scoped, tag = 'scoped memory for moco_forward.1']
    #allocation5 [shape = 'u8[131072]{0}', space=vmem, size = 0x20000, scoped, tag = 'input window, operand 6, single buffered']
    #allocation6 [shape = 's32[1]{0}', space=sflag, size = 0x4, scoped, tag = 'scoped memory for moco_forward.1']
    #allocation7 [shape = 'u8[524288]{0}', space=vmem, size = 0x80000, scoped, tag = 'output window, operand 0, single buffered']
    %16 = vsyncpa [#allocation3], 0
    %17 = vsyncpa [#allocation6], 0
    %18 = vsyncpa [#allocation4], 0
    // Predicated region
    $region2: #{moco_forward.1} parent=1 // pred_check
      _
    $region3: #{moco_forward.1} parent=1 // pred_check_branch
      %20 = sbr.rel (0) target = $region5
    $region4: #{moco_forward.1} parent=1 // pred_region
      _
    $region5: #{moco_forward.1} parent=1 // pred_fallthru
      _
    // Predicated region
    $region6: #{moco_forward.1} parent=1 // pred_check
      _
    $region7: #{moco_forward.1} parent=1 // pred_check_branch
      %22 = sbr.rel (0) target = $region9
    $region8: #{moco_forward.1} parent=1 // pred_region
      _
    $region9: #{moco_forward.1} parent=1 // pred_fallthru
      _
    // Predicated region
    $region10: #{moco_forward.1} parent=1 // pred_check
      _
    $region11: #{moco_forward.1} parent=1 // pred_check_branch
      %24 = sbr.rel (0) target = $region13
    $region12: #{moco_forward.1} parent=1 // pred_region
      _
    $region13: #{moco_forward.1} parent=1 // pred_fallthru
      _
    // Predicated region
    $region14: #{moco_forward.1} parent=1 // pred_check
      _
    $region15: #{moco_forward.1} parent=1 // pred_check_branch
      %26 = sbr.rel (0) target = $region17
    $region16: #{moco_forward.1} parent=1 // pred_region
      _
    $region17: #{moco_forward.1} parent=1 // pred_fallthru
      _
    // Predicated region
    $region18: #{moco_forward.1} parent=1 // pred_check
      _
    $region19: #{moco_forward.1} parent=1 // pred_check_branch
      %28 = sbr.rel (0) target = $region21
    $region20: #{moco_forward.1} parent=1 // pred_region
      %s30 = ssub.s32 16384, 16384
      %31 = vsyncadd [#allocation3], %s30
      %s32 = sshll.u32 [#allocation2], 4
      %s33 = int_to_ptr.vmem [resolvable:$true] %s32
      %38 = dma.hbm_to_vmem [thread:$0]  %s4, 16384, %s33, [#allocation3], 128, 128, 8
    $region21: #{moco_forward.1} parent=1 // pred_fallthru
      _
    // Predicated region
    $region22: #{moco_forward.1} parent=1 // pred_check
      _
    $region23: #{moco_forward.1} parent=1 // pred_check_branch
      %40 = sbr.rel (0) target = $region25
    $region24: #{moco_forward.1} parent=1 // pred_region
      _
    $region25: #{moco_forward.1} parent=1 // pred_fallthru
      _
    // Predicated region
    $region26: #{moco_forward.1} parent=1 // pred_check
      _
    $region27: #{moco_forward.1} parent=1 // pred_check_branch
      %42 = sbr.rel (0) target = $region29
    $region28: #{moco_forward.1} parent=1 // pred_region
      %s44 = ssub.s32 4096, 4096
      %45 = vsyncadd [#allocation6], %s44
      %s46 = sshll.u32 [#allocation5], 4
      %s47 = int_to_ptr.vmem [resolvable:$true] %s46
      %52 = dma.hbm_to_vmem [thread:$0]  %s6, 4096, %s47, [#allocation6], 128, 128, 8
    $region29: #{moco_forward.1} parent=1 // pred_fallthru
      _
    // Predicated region
    $region30: #{moco_forward.1} parent=1 // pred_check
      _
    $region31: #{moco_forward.1} parent=1 // pred_check_branch
      %54 = sbr.rel (0) target = $region33
    $region32: #{moco_forward.1} parent=1 // pred_region
      %55 = dma.done [#allocation3], 16384
    $region33: #{moco_forward.1} parent=1 // pred_fallthru
      _
    // Predicated region
    $region34: #{moco_forward.1} parent=1 // pred_check
      _
    $region35: #{moco_forward.1} parent=1 // pred_check_branch
      %57 = sbr.rel (0) target = $region37
    $region36: #{moco_forward.1} parent=1 // pred_region
      %58 = dma.done [#allocation6], 4096
    $region37: #{moco_forward.1} parent=1 // pred_fallthru
      _
    %v60 = vld [vmem:[#allocation2] sm:$0xff]
    %v61 = vld [vmem:[#allocation2 + $0x8] sm:$0xff]
    %v62 = vld [vmem:[#allocation2 + $0x10] sm:$0xff]
    %v63 = vld [vmem:[#allocation2 + $0x18] sm:$0xff]
    %v64 = vld [vmem:[#allocation2 + $0x20] sm:$0xff]
    %v65 = vld [vmem:[#allocation2 + $0x28] sm:$0xff]
    %v66 = vld [vmem:[#allocation2 + $0x30] sm:$0xff]
    %v67 = vld [vmem:[#allocation2 + $0x38] sm:$0xff]
    %v68 = vld [vmem:[#allocation2 + $0x40] sm:$0xff]
    %v69 = vld [vmem:[#allocation2 + $0x48] sm:$0xff]
    %v70 = vld [vmem:[#allocation2 + $0x50] sm:$0xff]
    %v71 = vld [vmem:[#allocation2 + $0x58] sm:$0xff]
    %v72 = vld [vmem:[#allocation2 + $0x60] sm:$0xff]
    %v73 = vld [vmem:[#allocation2 + $0x68] sm:$0xff]
    %v74 = vld [vmem:[#allocation2 + $0x70] sm:$0xff]
    %v75 = vld [vmem:[#allocation2 + $0x78] sm:$0xff]
    %v76 = vld [vmem:[#allocation2 + $0x80] sm:$0xff]
    %v77 = vld [vmem:[#allocation2 + $0x88] sm:$0xff]
    %v78 = vld [vmem:[#allocation2 + $0x90] sm:$0xff]
    %v79 = vld [vmem:[#allocation2 + $0x98] sm:$0xff]
    %v80 = vld [vmem:[#allocation2 + $0xa0] sm:$0xff]
    %v81 = vld [vmem:[#allocation2 + $0xa8] sm:$0xff]
    %v82 = vld [vmem:[#allocation2 + $0xb0] sm:$0xff]
    %v83 = vld [vmem:[#allocation2 + $0xb8] sm:$0xff]
    %v84 = vld [vmem:[#allocation2 + $0xc0] sm:$0xff]
    %v85 = vld [vmem:[#allocation2 + $0xc8] sm:$0xff]
    %v86 = vld [vmem:[#allocation2 + $0xd0] sm:$0xff]
    %v87 = vld [vmem:[#allocation2 + $0xd8] sm:$0xff]
    %v88 = vld [vmem:[#allocation2 + $0xe0] sm:$0xff]
    %v89 = vld [vmem:[#allocation2 + $0xe8] sm:$0xff]
    %v90 = vld [vmem:[#allocation2 + $0xf0] sm:$0xff]
    %v91 = vld [vmem:[#allocation2 + $0xf8] sm:$0xff]
    %v92 = vld [vmem:[#allocation2 + $0x100] sm:$0xff]
    %v93 = vld [vmem:[#allocation2 + $0x108] sm:$0xff]
    %v94 = vld [vmem:[#allocation2 + $0x110] sm:$0xff]
    %v95 = vld [vmem:[#allocation2 + $0x118] sm:$0xff]
    %v96 = vld [vmem:[#allocation2 + $0x120] sm:$0xff]
    %v97 = vld [vmem:[#allocation2 + $0x128] sm:$0xff]
    %v98 = vld [vmem:[#allocation2 + $0x130] sm:$0xff]
    %v99 = vld [vmem:[#allocation2 + $0x138] sm:$0xff]
    %v100 = vld [vmem:[#allocation2 + $0x140] sm:$0xff]
    %v101 = vld [vmem:[#allocation2 + $0x148] sm:$0xff]
    %v102 = vld [vmem:[#allocation2 + $0x150] sm:$0xff]
    %v103 = vld [vmem:[#allocation2 + $0x158] sm:$0xff]
    %v104 = vld [vmem:[#allocation2 + $0x160] sm:$0xff]
    %v105 = vld [vmem:[#allocation2 + $0x168] sm:$0xff]
    %v106 = vld [vmem:[#allocation2 + $0x170] sm:$0xff]
    %v107 = vld [vmem:[#allocation2 + $0x178] sm:$0xff]
    %v108 = vld [vmem:[#allocation2 + $0x180] sm:$0xff]
    %v109 = vld [vmem:[#allocation2 + $0x188] sm:$0xff]
    %v110 = vld [vmem:[#allocation2 + $0x190] sm:$0xff]
    %v111 = vld [vmem:[#allocation2 + $0x198] sm:$0xff]
    %v112 = vld [vmem:[#allocation2 + $0x1a0] sm:$0xff]
    %v113 = vld [vmem:[#allocation2 + $0x1a8] sm:$0xff]
    %v114 = vld [vmem:[#allocation2 + $0x1b0] sm:$0xff]
    %v115 = vld [vmem:[#allocation2 + $0x1b8] sm:$0xff]
    %v116 = vld [vmem:[#allocation2 + $0x1c0] sm:$0xff]
    %v117 = vld [vmem:[#allocation2 + $0x1c8] sm:$0xff]
    %v118 = vld [vmem:[#allocation2 + $0x1d0] sm:$0xff]
    %v119 = vld [vmem:[#allocation2 + $0x1d8] sm:$0xff]
    %v120 = vld [vmem:[#allocation2 + $0x1e0] sm:$0xff]
    %v121 = vld [vmem:[#allocation2 + $0x1e8] sm:$0xff]
    %v122 = vld [vmem:[#allocation2 + $0x1f0] sm:$0xff]
    %v123 = vld [vmem:[#allocation2 + $0x1f8] sm:$0xff]
    %v124 = vld [vmem:[#allocation2 + $0x200] sm:$0xff]
    %v125 = vld [vmem:[#allocation2 + $0x208] sm:$0xff]
    %v126 = vld [vmem:[#allocation2 + $0x210] sm:$0xff]
    %v127 = vld [vmem:[#allocation2 + $0x218] sm:$0xff]
    %v128 = vld [vmem:[#allocation2 + $0x220] sm:$0xff]
    %v129 = vld [vmem:[#allocation2 + $0x228] sm:$0xff]
    %v130 = vld [vmem:[#allocation2 + $0x230] sm:$0xff]
    %v131 = vld [vmem:[#allocation2 + $0x238] sm:$0xff]
    %v132 = vld [vmem:[#allocation2 + $0x240] sm:$0xff]
    %v133 = vld [vmem:[#allocation2 + $0x248] sm:$0xff]
    %v134 = vld [vmem:[#allocation2 + $0x250] sm:$0xff]
    %v135 = vld [vmem:[#allocation2 + $0x258] sm:$0xff]
    %v136 = vld [vmem:[#allocation2 + $0x260] sm:$0xff]
    %v137 = vld [vmem:[#allocation2 + $0x268] sm:$0xff]
    %v138 = vld [vmem:[#allocation2 + $0x270] sm:$0xff]
    %v139 = vld [vmem:[#allocation2 + $0x278] sm:$0xff]
    %v140 = vld [vmem:[#allocation2 + $0x280] sm:$0xff]
    %v141 = vld [vmem:[#allocation2 + $0x288] sm:$0xff]
    %v142 = vld [vmem:[#allocation2 + $0x290] sm:$0xff]
    %v143 = vld [vmem:[#allocation2 + $0x298] sm:$0xff]
    %v144 = vld [vmem:[#allocation2 + $0x2a0] sm:$0xff]
    %v145 = vld [vmem:[#allocation2 + $0x2a8] sm:$0xff]
    %v146 = vld [vmem:[#allocation2 + $0x2b0] sm:$0xff]
    %v147 = vld [vmem:[#allocation2 + $0x2b8] sm:$0xff]
    %v148 = vld [vmem:[#allocation2 + $0x2c0] sm:$0xff]
    %v149 = vld [vmem:[#allocation2 + $0x2c8] sm:$0xff]
    %v150 = vld [vmem:[#allocation2 + $0x2d0] sm:$0xff]
    %v151 = vld [vmem:[#allocation2 + $0x2d8] sm:$0xff]
    %v152 = vld [vmem:[#allocation2 + $0x2e0] sm:$0xff]
    %v153 = vld [vmem:[#allocation2 + $0x2e8] sm:$0xff]
    %v154 = vld [vmem:[#allocation2 + $0x2f0] sm:$0xff]
    %v155 = vld [vmem:[#allocation2 + $0x2f8] sm:$0xff]
    %v156 = vld [vmem:[#allocation2 + $0x300] sm:$0xff]
    %v157 = vld [vmem:[#allocation2 + $0x308] sm:$0xff]
    %v158 = vld [vmem:[#allocation2 + $0x310] sm:$0xff]
    %v159 = vld [vmem:[#allocation2 + $0x318] sm:$0xff]
    %v160 = vld [vmem:[#allocation2 + $0x320] sm:$0xff]
    %v161 = vld [vmem:[#allocation2 + $0x328] sm:$0xff]
    %v162 = vld [vmem:[#allocation2 + $0x330] sm:$0xff]
    %v163 = vld [vmem:[#allocation2 + $0x338] sm:$0xff]
    %v164 = vld [vmem:[#allocation2 + $0x340] sm:$0xff]
    %v165 = vld [vmem:[#allocation2 + $0x348] sm:$0xff]
    %v166 = vld [vmem:[#allocation2 + $0x350] sm:$0xff]
    %v167 = vld [vmem:[#allocation2 + $0x358] sm:$0xff]
    %v168 = vld [vmem:[#allocation2 + $0x360] sm:$0xff]
    %v169 = vld [vmem:[#allocation2 + $0x368] sm:$0xff]
    %v170 = vld [vmem:[#allocation2 + $0x370] sm:$0xff]
    %v171 = vld [vmem:[#allocation2 + $0x378] sm:$0xff]
    %v172 = vld [vmem:[#allocation2 + $0x380] sm:$0xff]
    %v173 = vld [vmem:[#allocation2 + $0x388] sm:$0xff]
    %v174 = vld [vmem:[#allocation2 + $0x390] sm:$0xff]
    %v175 = vld [vmem:[#allocation2 + $0x398] sm:$0xff]
    %v176 = vld [vmem:[#allocation2 + $0x3a0] sm:$0xff]
    %v177 = vld [vmem:[#allocation2 + $0x3a8] sm:$0xff]
    %v178 = vld [vmem:[#allocation2 + $0x3b0] sm:$0xff]
    %v179 = vld [vmem:[#allocation2 + $0x3b8] sm:$0xff]
    %v180 = vld [vmem:[#allocation2 + $0x3c0] sm:$0xff]
    %v181 = vld [vmem:[#allocation2 + $0x3c8] sm:$0xff]
    %v182 = vld [vmem:[#allocation2 + $0x3d0] sm:$0xff]
    %v183 = vld [vmem:[#allocation2 + $0x3d8] sm:$0xff]
    %v184 = vld [vmem:[#allocation2 + $0x3e0] sm:$0xff]
    %v185 = vld [vmem:[#allocation2 + $0x3e8] sm:$0xff]
    %v186 = vld [vmem:[#allocation2 + $0x3f0] sm:$0xff]
    %v187 = vld [vmem:[#allocation2 + $0x3f8] sm:$0xff]
    %v188 = vmul.f32 %v60, 0.999
    %v189 = vmul.f32 %v61, 0.999
    %v190 = vmul.f32 %v62, 0.999
    %v191 = vmul.f32 %v63, 0.999
    %v192 = vmul.f32 %v64, 0.999
    %v193 = vmul.f32 %v65, 0.999
    %v194 = vmul.f32 %v66, 0.999
    %v195 = vmul.f32 %v67, 0.999
    %v196 = vmul.f32 %v68, 0.999
    %v197 = vmul.f32 %v69, 0.999
    %v198 = vmul.f32 %v70, 0.999
    %v199 = vmul.f32 %v71, 0.999
    %v200 = vmul.f32 %v72, 0.999
    %v201 = vmul.f32 %v73, 0.999
    %v202 = vmul.f32 %v74, 0.999
    %v203 = vmul.f32 %v75, 0.999
    %v204 = vmul.f32 %v76, 0.999
    %v205 = vmul.f32 %v77, 0.999
    %v206 = vmul.f32 %v78, 0.999
    %v207 = vmul.f32 %v79, 0.999
    %v208 = vmul.f32 %v80, 0.999
    %v209 = vmul.f32 %v81, 0.999
    %v210 = vmul.f32 %v82, 0.999
    %v211 = vmul.f32 %v83, 0.999
    %v212 = vmul.f32 %v84, 0.999
    %v213 = vmul.f32 %v85, 0.999
    %v214 = vmul.f32 %v86, 0.999
    %v215 = vmul.f32 %v87, 0.999
    %v216 = vmul.f32 %v88, 0.999
    %v217 = vmul.f32 %v89, 0.999
    %v218 = vmul.f32 %v90, 0.999
    %v219 = vmul.f32 %v91, 0.999
    %v220 = vmul.f32 %v92, 0.999
    %v221 = vmul.f32 %v93, 0.999
    %v222 = vmul.f32 %v94, 0.999
    %v223 = vmul.f32 %v95, 0.999
    %v224 = vmul.f32 %v96, 0.999
    %v225 = vmul.f32 %v97, 0.999
    %v226 = vmul.f32 %v98, 0.999
    %v227 = vmul.f32 %v99, 0.999
    %v228 = vmul.f32 %v100, 0.999
    %v229 = vmul.f32 %v101, 0.999
    %v230 = vmul.f32 %v102, 0.999
    %v231 = vmul.f32 %v103, 0.999
    %v232 = vmul.f32 %v104, 0.999
    %v233 = vmul.f32 %v105, 0.999
    %v234 = vmul.f32 %v106, 0.999
    %v235 = vmul.f32 %v107, 0.999
    %v236 = vmul.f32 %v108, 0.999
    %v237 = vmul.f32 %v109, 0.999
    %v238 = vmul.f32 %v110, 0.999
    %v239 = vmul.f32 %v111, 0.999
    %v240 = vmul.f32 %v112, 0.999
    %v241 = vmul.f32 %v113, 0.999
    %v242 = vmul.f32 %v114, 0.999
    %v243 = vmul.f32 %v115, 0.999
    %v244 = vmul.f32 %v116, 0.999
    %v245 = vmul.f32 %v117, 0.999
    %v246 = vmul.f32 %v118, 0.999
    %v247 = vmul.f32 %v119, 0.999
    %v248 = vmul.f32 %v120, 0.999
    %v249 = vmul.f32 %v121, 0.999
    %v250 = vmul.f32 %v122, 0.999
    %v251 = vmul.f32 %v123, 0.999
    %v252 = vmul.f32 %v124, 0.999
    %v253 = vmul.f32 %v125, 0.999
    %v254 = vmul.f32 %v126, 0.999
    %v255 = vmul.f32 %v127, 0.999
    %v256 = vmul.f32 %v128, 0.999
    %v257 = vmul.f32 %v129, 0.999
    %v258 = vmul.f32 %v130, 0.999
    %v259 = vmul.f32 %v131, 0.999
    %v260 = vmul.f32 %v132, 0.999
    %v261 = vmul.f32 %v133, 0.999
    %v262 = vmul.f32 %v134, 0.999
    %v263 = vmul.f32 %v135, 0.999
    %v264 = vmul.f32 %v136, 0.999
    %v265 = vmul.f32 %v137, 0.999
    %v266 = vmul.f32 %v138, 0.999
    %v267 = vmul.f32 %v139, 0.999
    %v268 = vmul.f32 %v140, 0.999
    %v269 = vmul.f32 %v141, 0.999
    %v270 = vmul.f32 %v142, 0.999
    %v271 = vmul.f32 %v143, 0.999
    %v272 = vmul.f32 %v144, 0.999
    %v273 = vmul.f32 %v145, 0.999
    %v274 = vmul.f32 %v146, 0.999
    %v275 = vmul.f32 %v147, 0.999
    %v276 = vmul.f32 %v148, 0.999
    %v277 = vmul.f32 %v149, 0.999
    %v278 = vmul.f32 %v150, 0.999
    %v279 = vmul.f32 %v151, 0.999
    %v280 = vmul.f32 %v152, 0.999
    %v281 = vmul.f32 %v153, 0.999
    %v282 = vmul.f32 %v154, 0.999
    %v283 = vmul.f32 %v155, 0.999
    %v284 = vmul.f32 %v156, 0.999
    %v285 = vmul.f32 %v157, 0.999
    %v286 = vmul.f32 %v158, 0.999
    %v287 = vmul.f32 %v159, 0.999
    %v288 = vmul.f32 %v160, 0.999
    %v289 = vmul.f32 %v161, 0.999
    %v290 = vmul.f32 %v162, 0.999
    %v291 = vmul.f32 %v163, 0.999
    %v292 = vmul.f32 %v164, 0.999
    %v293 = vmul.f32 %v165, 0.999
    %v294 = vmul.f32 %v166, 0.999
    %v295 = vmul.f32 %v167, 0.999
    %v296 = vmul.f32 %v168, 0.999
    %v297 = vmul.f32 %v169, 0.999
    %v298 = vmul.f32 %v170, 0.999
    %v299 = vmul.f32 %v171, 0.999
    %v300 = vmul.f32 %v172, 0.999
    %v301 = vmul.f32 %v173, 0.999
    %v302 = vmul.f32 %v174, 0.999
    %v303 = vmul.f32 %v175, 0.999
    %v304 = vmul.f32 %v176, 0.999
    %v305 = vmul.f32 %v177, 0.999
    %v306 = vmul.f32 %v178, 0.999
    %v307 = vmul.f32 %v179, 0.999
    %v308 = vmul.f32 %v180, 0.999
    %v309 = vmul.f32 %v181, 0.999
    %v310 = vmul.f32 %v182, 0.999
    %v311 = vmul.f32 %v183, 0.999
    %v312 = vmul.f32 %v184, 0.999
    %v313 = vmul.f32 %v185, 0.999
    %v314 = vmul.f32 %v186, 0.999
    %v315 = vmul.f32 %v187, 0.999
    %v316 = vld [vmem:[%s2] sm:$0xff]
    %v317 = vld [vmem:[%s2 + $0x8] sm:$0xff]
    %v318 = vld [vmem:[%s2 + $0x10] sm:$0xff]
    %v319 = vld [vmem:[%s2 + $0x18] sm:$0xff]
    %v320 = vld [vmem:[%s2 + $0x20] sm:$0xff]
    %v321 = vld [vmem:[%s2 + $0x28] sm:$0xff]
    %v322 = vld [vmem:[%s2 + $0x30] sm:$0xff]
    %v323 = vld [vmem:[%s2 + $0x38] sm:$0xff]
    %v324 = vld [vmem:[%s2 + $0x40] sm:$0xff]
    %v325 = vld [vmem:[%s2 + $0x48] sm:$0xff]
    %v326 = vld [vmem:[%s2 + $0x50] sm:$0xff]
    %v327 = vld [vmem:[%s2 + $0x58] sm:$0xff]
    %v328 = vld [vmem:[%s2 + $0x60] sm:$0xff]
    %v329 = vld [vmem:[%s2 + $0x68] sm:$0xff]
    %v330 = vld [vmem:[%s2 + $0x70] sm:$0xff]
    %v331 = vld [vmem:[%s2 + $0x78] sm:$0xff]
    %v332 = vld [vmem:[%s2 + $0x80] sm:$0xff]
    %v333 = vld [vmem:[%s2 + $0x88] sm:$0xff]
    %v334 = vld [vmem:[%s2 + $0x90] sm:$0xff]
    %v335 = vld [vmem:[%s2 + $0x98] sm:$0xff]
    %v336 = vld [vmem:[%s2 + $0xa0] sm:$0xff]
    %v337 = vld [vmem:[%s2 + $0xa8] sm:$0xff]
    %v338 = vld [vmem:[%s2 + $0xb0] sm:$0xff]
    %v339 = vld [vmem:[%s2 + $0xb8] sm:$0xff]
    %v340 = vld [vmem:[%s2 + $0xc0] sm:$0xff]
    %v341 = vld [vmem:[%s2 + $0xc8] sm:$0xff]
    %v342 = vld [vmem:[%s2 + $0xd0] sm:$0xff]
    %v343 = vld [vmem:[%s2 + $0xd8] sm:$0xff]
    %v344 = vld [vmem:[%s2 + $0xe0] sm:$0xff]
    %v345 = vld [vmem:[%s2 + $0xe8] sm:$0xff]
    %v346 = vld [vmem:[%s2 + $0xf0] sm:$0xff]
    %v347 = vld [vmem:[%s2 + $0xf8] sm:$0xff]
    %v348 = vld [vmem:[%s2 + $0x100] sm:$0xff]
    %v349 = vld [vmem:[%s2 + $0x108] sm:$0xff]
    %v350 = vld [vmem:[%s2 + $0x110] sm:$0xff]
    %v351 = vld [vmem:[%s2 + $0x118] sm:$0xff]
    %v352 = vld [vmem:[%s2 + $0x120] sm:$0xff]
    %v353 = vld [vmem:[%s2 + $0x128] sm:$0xff]
    %v354 = vld [vmem:[%s2 + $0x130] sm:$0xff]
    %v355 = vld [vmem:[%s2 + $0x138] sm:$0xff]
    %v356 = vld [vmem:[%s2 + $0x140] sm:$0xff]
    %v357 = vld [vmem:[%s2 + $0x148] sm:$0xff]
    %v358 = vld [vmem:[%s2 + $0x150] sm:$0xff]
    %v359 = vld [vmem:[%s2 + $0x158] sm:$0xff]
    %v360 = vld [vmem:[%s2 + $0x160] sm:$0xff]
    %v361 = vld [vmem:[%s2 + $0x168] sm:$0xff]
    %v362 = vld [vmem:[%s2 + $0x170] sm:$0xff]
    %v363 = vld [vmem:[%s2 + $0x178] sm:$0xff]
    %v364 = vld [vmem:[%s2 + $0x180] sm:$0xff]
    %v365 = vld [vmem:[%s2 + $0x188] sm:$0xff]
    %v366 = vld [vmem:[%s2 + $0x190] sm:$0xff]
    %v367 = vld [vmem:[%s2 + $0x198] sm:$0xff]
    %v368 = vld [vmem:[%s2 + $0x1a0] sm:$0xff]
    %v369 = vld [vmem:[%s2 + $0x1a8] sm:$0xff]
    %v370 = vld [vmem:[%s2 + $0x1b0] sm:$0xff]
    %v371 = vld [vmem:[%s2 + $0x1b8] sm:$0xff]
    %v372 = vld [vmem:[%s2 + $0x1c0] sm:$0xff]
    %v373 = vld [vmem:[%s2 + $0x1c8] sm:$0xff]
    %v374 = vld [vmem:[%s2 + $0x1d0] sm:$0xff]
    %v375 = vld [vmem:[%s2 + $0x1d8] sm:$0xff]
    %v376 = vld [vmem:[%s2 + $0x1e0] sm:$0xff]
    %v377 = vld [vmem:[%s2 + $0x1e8] sm:$0xff]
    %v378 = vld [vmem:[%s2 + $0x1f0] sm:$0xff]
    %v379 = vld [vmem:[%s2 + $0x1f8] sm:$0xff]
    %v380 = vld [vmem:[%s2 + $0x200] sm:$0xff]
    %v381 = vld [vmem:[%s2 + $0x208] sm:$0xff]
    %v382 = vld [vmem:[%s2 + $0x210] sm:$0xff]
    %v383 = vld [vmem:[%s2 + $0x218] sm:$0xff]
    %v384 = vld [vmem:[%s2 + $0x220] sm:$0xff]
    %v385 = vld [vmem:[%s2 + $0x228] sm:$0xff]
    %v386 = vld [vmem:[%s2 + $0x230] sm:$0xff]
    %v387 = vld [vmem:[%s2 + $0x238] sm:$0xff]
    %v388 = vld [vmem:[%s2 + $0x240] sm:$0xff]
    %v389 = vld [vmem:[%s2 + $0x248] sm:$0xff]
    %v390 = vld [vmem:[%s2 + $0x250] sm:$0xff]
    %v391 = vld [vmem:[%s2 + $0x258] sm:$0xff]
    %v392 = vld [vmem:[%s2 + $0x260] sm:$0xff]
    %v393 = vld [vmem:[%s2 + $0x268] sm:$0xff]
    %v394 = vld [vmem:[%s2 + $0x270] sm:$0xff]
    %v395 = vld [vmem:[%s2 + $0x278] sm:$0xff]
    %v396 = vld [vmem:[%s2 + $0x280] sm:$0xff]
    %v397 = vld [vmem:[%s2 + $0x288] sm:$0xff]
    %v398 = vld [vmem:[%s2 + $0x290] sm:$0xff]
    %v399 = vld [vmem:[%s2 + $0x298] sm:$0xff]
    %v400 = vld [vmem:[%s2 + $0x2a0] sm:$0xff]
    %v401 = vld [vmem:[%s2 + $0x2a8] sm:$0xff]
    %v402 = vld [vmem:[%s2 + $0x2b0] sm:$0xff]
    %v403 = vld [vmem:[%s2 + $0x2b8] sm:$0xff]
    %v404 = vld [vmem:[%s2 + $0x2c0] sm:$0xff]
    %v405 = vld [vmem:[%s2 + $0x2c8] sm:$0xff]
    %v406 = vld [vmem:[%s2 + $0x2d0] sm:$0xff]
    %v407 = vld [vmem:[%s2 + $0x2d8] sm:$0xff]
    %v408 = vld [vmem:[%s2 + $0x2e0] sm:$0xff]
    %v409 = vld [vmem:[%s2 + $0x2e8] sm:$0xff]
    %v410 = vld [vmem:[%s2 + $0x2f0] sm:$0xff]
    %v411 = vld [vmem:[%s2 + $0x2f8] sm:$0xff]
    %v412 = vld [vmem:[%s2 + $0x300] sm:$0xff]
    %v413 = vld [vmem:[%s2 + $0x308] sm:$0xff]
    %v414 = vld [vmem:[%s2 + $0x310] sm:$0xff]
    %v415 = vld [vmem:[%s2 + $0x318] sm:$0xff]
    %v416 = vld [vmem:[%s2 + $0x320] sm:$0xff]
    %v417 = vld [vmem:[%s2 + $0x328] sm:$0xff]
    %v418 = vld [vmem:[%s2 + $0x330] sm:$0xff]
    %v419 = vld [vmem:[%s2 + $0x338] sm:$0xff]
    %v420 = vld [vmem:[%s2 + $0x340] sm:$0xff]
    %v421 = vld [vmem:[%s2 + $0x348] sm:$0xff]
    %v422 = vld [vmem:[%s2 + $0x350] sm:$0xff]
    %v423 = vld [vmem:[%s2 + $0x358] sm:$0xff]
    %v424 = vld [vmem:[%s2 + $0x360] sm:$0xff]
    %v425 = vld [vmem:[%s2 + $0x368] sm:$0xff]
    %v426 = vld [vmem:[%s2 + $0x370] sm:$0xff]
    %v427 = vld [vmem:[%s2 + $0x378] sm:$0xff]
    %v428 = vld [vmem:[%s2 + $0x380] sm:$0xff]
    %v429 = vld [vmem:[%s2 + $0x388] sm:$0xff]
    %v430 = vld [vmem:[%s2 + $0x390] sm:$0xff]
    %v431 = vld [vmem:[%s2 + $0x398] sm:$0xff]
    %v432 = vld [vmem:[%s2 + $0x3a0] sm:$0xff]
    %v433 = vld [vmem:[%s2 + $0x3a8] sm:$0xff]
    %v434 = vld [vmem:[%s2 + $0x3b0] sm:$0xff]
    %v435 = vld [vmem:[%s2 + $0x3b8] sm:$0xff]
    %v436 = vld [vmem:[%s2 + $0x3c0] sm:$0xff]
    %v437 = vld [vmem:[%s2 + $0x3c8] sm:$0xff]
    %v438 = vld [vmem:[%s2 + $0x3d0] sm:$0xff]
    %v439 = vld [vmem:[%s2 + $0x3d8] sm:$0xff]
    %v440 = vld [vmem:[%s2 + $0x3e0] sm:$0xff]
    %v441 = vld [vmem:[%s2 + $0x3e8] sm:$0xff]
    %v442 = vld [vmem:[%s2 + $0x3f0] sm:$0xff]
    %v443 = vld [vmem:[%s2 + $0x3f8] sm:$0xff]
    %v444 = vmul.f32 %v316, 0.001
    %v445 = vmul.f32 %v317, 0.001
    %v446 = vmul.f32 %v318, 0.001
    %v447 = vmul.f32 %v319, 0.001
    %v448 = vmul.f32 %v320, 0.001
    %v449 = vmul.f32 %v321, 0.001
    %v450 = vmul.f32 %v322, 0.001
    %v451 = vmul.f32 %v323, 0.001
    %v452 = vmul.f32 %v324, 0.001
    %v453 = vmul.f32 %v325, 0.001
    %v454 = vmul.f32 %v326, 0.001
    %v455 = vmul.f32 %v327, 0.001
    %v456 = vmul.f32 %v328, 0.001
    %v457 = vmul.f32 %v329, 0.001
    %v458 = vmul.f32 %v330, 0.001
    %v459 = vmul.f32 %v331, 0.001
    %v460 = vmul.f32 %v332, 0.001
    %v461 = vmul.f32 %v333, 0.001
    %v462 = vmul.f32 %v334, 0.001
    %v463 = vmul.f32 %v335, 0.001
    %v464 = vmul.f32 %v336, 0.001
    %v465 = vmul.f32 %v337, 0.001
    %v466 = vmul.f32 %v338, 0.001
    %v467 = vmul.f32 %v339, 0.001
    %v468 = vmul.f32 %v340, 0.001
    %v469 = vmul.f32 %v341, 0.001
    %v470 = vmul.f32 %v342, 0.001
    %v471 = vmul.f32 %v343, 0.001
    %v472 = vmul.f32 %v344, 0.001
    %v473 = vmul.f32 %v345, 0.001
    %v474 = vmul.f32 %v346, 0.001
    %v475 = vmul.f32 %v347, 0.001
    %v476 = vmul.f32 %v348, 0.001
    %v477 = vmul.f32 %v349, 0.001
    %v478 = vmul.f32 %v350, 0.001
    %v479 = vmul.f32 %v351, 0.001
    %v480 = vmul.f32 %v352, 0.001
    %v481 = vmul.f32 %v353, 0.001
    %v482 = vmul.f32 %v354, 0.001
    %v483 = vmul.f32 %v355, 0.001
    %v484 = vmul.f32 %v356, 0.001
    %v485 = vmul.f32 %v357, 0.001
    %v486 = vmul.f32 %v358, 0.001
    %v487 = vmul.f32 %v359, 0.001
    %v488 = vmul.f32 %v360, 0.001
    %v489 = vmul.f32 %v361, 0.001
    %v490 = vmul.f32 %v362, 0.001
    %v491 = vmul.f32 %v363, 0.001
    %v492 = vmul.f32 %v364, 0.001
    %v493 = vmul.f32 %v365, 0.001
    %v494 = vmul.f32 %v366, 0.001
    %v495 = vmul.f32 %v367, 0.001
    %v496 = vmul.f32 %v368, 0.001
    %v497 = vmul.f32 %v369, 0.001
    %v498 = vmul.f32 %v370, 0.001
    %v499 = vmul.f32 %v371, 0.001
    %v500 = vmul.f32 %v372, 0.001
    %v501 = vmul.f32 %v373, 0.001
    %v502 = vmul.f32 %v374, 0.001
    %v503 = vmul.f32 %v375, 0.001
    %v504 = vmul.f32 %v376, 0.001
    %v505 = vmul.f32 %v377, 0.001
    %v506 = vmul.f32 %v378, 0.001
    %v507 = vmul.f32 %v379, 0.001
    %v508 = vmul.f32 %v380, 0.001
    %v509 = vmul.f32 %v381, 0.001
    %v510 = vmul.f32 %v382, 0.001
    %v511 = vmul.f32 %v383, 0.001
    %v512 = vmul.f32 %v384, 0.001
    %v513 = vmul.f32 %v385, 0.001
    %v514 = vmul.f32 %v386, 0.001
    %v515 = vmul.f32 %v387, 0.001
    %v516 = vmul.f32 %v388, 0.001
    %v517 = vmul.f32 %v389, 0.001
    %v518 = vmul.f32 %v390, 0.001
    %v519 = vmul.f32 %v391, 0.001
    %v520 = vmul.f32 %v392, 0.001
    %v521 = vmul.f32 %v393, 0.001
    %v522 = vmul.f32 %v394, 0.001
    %v523 = vmul.f32 %v395, 0.001
    %v524 = vmul.f32 %v396, 0.001
    %v525 = vmul.f32 %v397, 0.001
    %v526 = vmul.f32 %v398, 0.001
    %v527 = vmul.f32 %v399, 0.001
    %v528 = vmul.f32 %v400, 0.001
    %v529 = vmul.f32 %v401, 0.001
    %v530 = vmul.f32 %v402, 0.001
    %v531 = vmul.f32 %v403, 0.001
    %v532 = vmul.f32 %v404, 0.001
    %v533 = vmul.f32 %v405, 0.001
    %v534 = vmul.f32 %v406, 0.001
    %v535 = vmul.f32 %v407, 0.001
    %v536 = vmul.f32 %v408, 0.001
    %v537 = vmul.f32 %v409, 0.001
    %v538 = vmul.f32 %v410, 0.001
    %v539 = vmul.f32 %v411, 0.001
    %v540 = vmul.f32 %v412, 0.001
    %v541 = vmul.f32 %v413, 0.001
    %v542 = vmul.f32 %v414, 0.001
    %v543 = vmul.f32 %v415, 0.001
    %v544 = vmul.f32 %v416, 0.001
    %v545 = vmul.f32 %v417, 0.001
    %v546 = vmul.f32 %v418, 0.001
    %v547 = vmul.f32 %v419, 0.001
    %v548 = vmul.f32 %v420, 0.001
    %v549 = vmul.f32 %v421, 0.001
    %v550 = vmul.f32 %v422, 0.001
    %v551 = vmul.f32 %v423, 0.001
    %v552 = vmul.f32 %v424, 0.001
    %v553 = vmul.f32 %v425, 0.001
    %v554 = vmul.f32 %v426, 0.001
    %v555 = vmul.f32 %v427, 0.001
    %v556 = vmul.f32 %v428, 0.001
    %v557 = vmul.f32 %v429, 0.001
    %v558 = vmul.f32 %v430, 0.001
    %v559 = vmul.f32 %v431, 0.001
    %v560 = vmul.f32 %v432, 0.001
    %v561 = vmul.f32 %v433, 0.001
    %v562 = vmul.f32 %v434, 0.001
    %v563 = vmul.f32 %v435, 0.001
    %v564 = vmul.f32 %v436, 0.001
    %v565 = vmul.f32 %v437, 0.001
    %v566 = vmul.f32 %v438, 0.001
    %v567 = vmul.f32 %v439, 0.001
    %v568 = vmul.f32 %v440, 0.001
    %v569 = vmul.f32 %v441, 0.001
    %v570 = vmul.f32 %v442, 0.001
    %v571 = vmul.f32 %v443, 0.001
    %v572 = vadd.f32 %v188, %v444
    %v573 = vadd.f32 %v189, %v445
    %v574 = vadd.f32 %v190, %v446
    %v575 = vadd.f32 %v191, %v447
    %v576 = vadd.f32 %v192, %v448
    %v577 = vadd.f32 %v193, %v449
    %v578 = vadd.f32 %v194, %v450
    %v579 = vadd.f32 %v195, %v451
    %v580 = vadd.f32 %v196, %v452
    %v581 = vadd.f32 %v197, %v453
    %v582 = vadd.f32 %v198, %v454
    %v583 = vadd.f32 %v199, %v455
    %v584 = vadd.f32 %v200, %v456
    %v585 = vadd.f32 %v201, %v457
    %v586 = vadd.f32 %v202, %v458
    %v587 = vadd.f32 %v203, %v459
    %v588 = vadd.f32 %v204, %v460
    %v589 = vadd.f32 %v205, %v461
    %v590 = vadd.f32 %v206, %v462
    %v591 = vadd.f32 %v207, %v463
    %v592 = vadd.f32 %v208, %v464
    %v593 = vadd.f32 %v209, %v465
    %v594 = vadd.f32 %v210, %v466
    %v595 = vadd.f32 %v211, %v467
    %v596 = vadd.f32 %v212, %v468
    %v597 = vadd.f32 %v213, %v469
    %v598 = vadd.f32 %v214, %v470
    %v599 = vadd.f32 %v215, %v471
    %v600 = vadd.f32 %v216, %v472
    %v601 = vadd.f32 %v217, %v473
    %v602 = vadd.f32 %v218, %v474
    %v603 = vadd.f32 %v219, %v475
    %v604 = vadd.f32 %v220, %v476
    %v605 = vadd.f32 %v221, %v477
    %v606 = vadd.f32 %v222, %v478
    %v607 = vadd.f32 %v223, %v479
    %v608 = vadd.f32 %v224, %v480
    %v609 = vadd.f32 %v225, %v481
    %v610 = vadd.f32 %v226, %v482
    %v611 = vadd.f32 %v227, %v483
    %v612 = vadd.f32 %v228, %v484
    %v613 = vadd.f32 %v229, %v485
    %v614 = vadd.f32 %v230, %v486
    %v615 = vadd.f32 %v231, %v487
    %v616 = vadd.f32 %v232, %v488
    %v617 = vadd.f32 %v233, %v489
    %v618 = vadd.f32 %v234, %v490
    %v619 = vadd.f32 %v235, %v491
    %v620 = vadd.f32 %v236, %v492
    %v621 = vadd.f32 %v237, %v493
    %v622 = vadd.f32 %v238, %v494
    %v623 = vadd.f32 %v239, %v495
    %v624 = vadd.f32 %v240, %v496
    %v625 = vadd.f32 %v241, %v497
    %v626 = vadd.f32 %v242, %v498
    %v627 = vadd.f32 %v243, %v499
    %v628 = vadd.f32 %v244, %v500
    %v629 = vadd.f32 %v245, %v501
    %v630 = vadd.f32 %v246, %v502
    %v631 = vadd.f32 %v247, %v503
    %v632 = vadd.f32 %v248, %v504
    %v633 = vadd.f32 %v249, %v505
    %v634 = vadd.f32 %v250, %v506
    %v635 = vadd.f32 %v251, %v507
    %v636 = vadd.f32 %v252, %v508
    %v637 = vadd.f32 %v253, %v509
    %v638 = vadd.f32 %v254, %v510
    %v639 = vadd.f32 %v255, %v511
    %v640 = vadd.f32 %v256, %v512
    %v641 = vadd.f32 %v257, %v513
    %v642 = vadd.f32 %v258, %v514
    %v643 = vadd.f32 %v259, %v515
    %v644 = vadd.f32 %v260, %v516
    %v645 = vadd.f32 %v261, %v517
    %v646 = vadd.f32 %v262, %v518
    %v647 = vadd.f32 %v263, %v519
    %v648 = vadd.f32 %v264, %v520
    %v649 = vadd.f32 %v265, %v521
    %v650 = vadd.f32 %v266, %v522
    %v651 = vadd.f32 %v267, %v523
    %v652 = vadd.f32 %v268, %v524
    %v653 = vadd.f32 %v269, %v525
    %v654 = vadd.f32 %v270, %v526
    %v655 = vadd.f32 %v271, %v527
    %v656 = vadd.f32 %v272, %v528
    %v657 = vadd.f32 %v273, %v529
    %v658 = vadd.f32 %v274, %v530
    %v659 = vadd.f32 %v275, %v531
    %v660 = vadd.f32 %v276, %v532
    %v661 = vadd.f32 %v277, %v533
    %v662 = vadd.f32 %v278, %v534
    %v663 = vadd.f32 %v279, %v535
    %v664 = vadd.f32 %v280, %v536
    %v665 = vadd.f32 %v281, %v537
    %v666 = vadd.f32 %v282, %v538
    %v667 = vadd.f32 %v283, %v539
    %v668 = vadd.f32 %v284, %v540
    %v669 = vadd.f32 %v285, %v541
    %v670 = vadd.f32 %v286, %v542
    %v671 = vadd.f32 %v287, %v543
    %v672 = vadd.f32 %v288, %v544
    %v673 = vadd.f32 %v289, %v545
    %v674 = vadd.f32 %v290, %v546
    %v675 = vadd.f32 %v291, %v547
    %v676 = vadd.f32 %v292, %v548
    %v677 = vadd.f32 %v293, %v549
    %v678 = vadd.f32 %v294, %v550
    %v679 = vadd.f32 %v295, %v551
    %v680 = vadd.f32 %v296, %v552
    %v681 = vadd.f32 %v297, %v553
    %v682 = vadd.f32 %v298, %v554
    %v683 = vadd.f32 %v299, %v555
    %v684 = vadd.f32 %v300, %v556
    %v685 = vadd.f32 %v301, %v557
    %v686 = vadd.f32 %v302, %v558
    %v687 = vadd.f32 %v303, %v559
    %v688 = vadd.f32 %v304, %v560
    %v689 = vadd.f32 %v305, %v561
    %v690 = vadd.f32 %v306, %v562
    %v691 = vadd.f32 %v307, %v563
    %v692 = vadd.f32 %v308, %v564
    %v693 = vadd.f32 %v309, %v565
    %v694 = vadd.f32 %v310, %v566
    %v695 = vadd.f32 %v311, %v567
    %v696 = vadd.f32 %v312, %v568
    %v697 = vadd.f32 %v313, %v569
    %v698 = vadd.f32 %v314, %v570
    %v699 = vadd.f32 %v315, %v571
    %v700 = vld [vmem:[%s5] sm:$0x1]
    %v701 = vmul.f32 %v700, 0.999
    %v702 = vld [vmem:[%s3] sm:$0x1]
    %v703 = vmul.f32 %v702, 0.001
    %v704 = vadd.f32 %v701, %v703
    %705 = vst [vmem:[#allocation7] sm:$0xff] %v572
    %706 = vst [vmem:[#allocation7 + $0x8] sm:$0xff] %v573
    %707 = vst [vmem:[#allocation7 + $0x10] sm:$0xff] %v574
    %708 = vst [vmem:[#allocation7 + $0x18] sm:$0xff] %v575
    %709 = vst [vmem:[#allocation7 + $0x20] sm:$0xff] %v576
    %710 = vst [vmem:[#allocation7 + $0x28] sm:$0xff] %v577
    %711 = vst [vmem:[#allocation7 + $0x30] sm:$0xff] %v578
    %712 = vst [vmem:[#allocation7 + $0x38] sm:$0xff] %v579
    %713 = vst [vmem:[#allocation7 + $0x40] sm:$0xff] %v580
    %714 = vst [vmem:[#allocation7 + $0x48] sm:$0xff] %v581
    %715 = vst [vmem:[#allocation7 + $0x50] sm:$0xff] %v582
    %716 = vst [vmem:[#allocation7 + $0x58] sm:$0xff] %v583
    %717 = vst [vmem:[#allocation7 + $0x60] sm:$0xff] %v584
    %718 = vst [vmem:[#allocation7 + $0x68] sm:$0xff] %v585
    %719 = vst [vmem:[#allocation7 + $0x70] sm:$0xff] %v586
    %720 = vst [vmem:[#allocation7 + $0x78] sm:$0xff] %v587
    %721 = vst [vmem:[#allocation7 + $0x80] sm:$0xff] %v588
    %722 = vst [vmem:[#allocation7 + $0x88] sm:$0xff] %v589
    %723 = vst [vmem:[#allocation7 + $0x90] sm:$0xff] %v590
    %724 = vst [vmem:[#allocation7 + $0x98] sm:$0xff] %v591
    %725 = vst [vmem:[#allocation7 + $0xa0] sm:$0xff] %v592
    %726 = vst [vmem:[#allocation7 + $0xa8] sm:$0xff] %v593
    %727 = vst [vmem:[#allocation7 + $0xb0] sm:$0xff] %v594
    %728 = vst [vmem:[#allocation7 + $0xb8] sm:$0xff] %v595
    %729 = vst [vmem:[#allocation7 + $0xc0] sm:$0xff] %v596
    %730 = vst [vmem:[#allocation7 + $0xc8] sm:$0xff] %v597
    %731 = vst [vmem:[#allocation7 + $0xd0] sm:$0xff] %v598
    %732 = vst [vmem:[#allocation7 + $0xd8] sm:$0xff] %v599
    %733 = vst [vmem:[#allocation7 + $0xe0] sm:$0xff] %v600
    %734 = vst [vmem:[#allocation7 + $0xe8] sm:$0xff] %v601
    %735 = vst [vmem:[#allocation7 + $0xf0] sm:$0xff] %v602
    %736 = vst [vmem:[#allocation7 + $0xf8] sm:$0xff] %v603
    %737 = vst [vmem:[#allocation7 + $0x100] sm:$0xff] %v604
    %738 = vst [vmem:[#allocation7 + $0x108] sm:$0xff] %v605
    %739 = vst [vmem:[#allocation7 + $0x110] sm:$0xff] %v606
    %740 = vst [vmem:[#allocation7 + $0x118] sm:$0xff] %v607
    %741 = vst [vmem:[#allocation7 + $0x120] sm:$0xff] %v608
    %742 = vst [vmem:[#allocation7 + $0x128] sm:$0xff] %v609
    %743 = vst [vmem:[#allocation7 + $0x130] sm:$0xff] %v610
    %744 = vst [vmem:[#allocation7 + $0x138] sm:$0xff] %v611
    %745 = vst [vmem:[#allocation7 + $0x140] sm:$0xff] %v612
    %746 = vst [vmem:[#allocation7 + $0x148] sm:$0xff] %v613
    %747 = vst [vmem:[#allocation7 + $0x150] sm:$0xff] %v614
    %748 = vst [vmem:[#allocation7 + $0x158] sm:$0xff] %v615
    %749 = vst [vmem:[#allocation7 + $0x160] sm:$0xff] %v616
    %750 = vst [vmem:[#allocation7 + $0x168] sm:$0xff] %v617
    %751 = vst [vmem:[#allocation7 + $0x170] sm:$0xff] %v618
    %752 = vst [vmem:[#allocation7 + $0x178] sm:$0xff] %v619
    %753 = vst [vmem:[#allocation7 + $0x180] sm:$0xff] %v620
    %754 = vst [vmem:[#allocation7 + $0x188] sm:$0xff] %v621
    %755 = vst [vmem:[#allocation7 + $0x190] sm:$0xff] %v622
    %756 = vst [vmem:[#allocation7 + $0x198] sm:$0xff] %v623
    %757 = vst [vmem:[#allocation7 + $0x1a0] sm:$0xff] %v624
    %758 = vst [vmem:[#allocation7 + $0x1a8] sm:$0xff] %v625
    %759 = vst [vmem:[#allocation7 + $0x1b0] sm:$0xff] %v626
    %760 = vst [vmem:[#allocation7 + $0x1b8] sm:$0xff] %v627
    %761 = vst [vmem:[#allocation7 + $0x1c0] sm:$0xff] %v628
    %762 = vst [vmem:[#allocation7 + $0x1c8] sm:$0xff] %v629
    %763 = vst [vmem:[#allocation7 + $0x1d0] sm:$0xff] %v630
    %764 = vst [vmem:[#allocation7 + $0x1d8] sm:$0xff] %v631
    %765 = vst [vmem:[#allocation7 + $0x1e0] sm:$0xff] %v632
    %766 = vst [vmem:[#allocation7 + $0x1e8] sm:$0xff] %v633
    %767 = vst [vmem:[#allocation7 + $0x1f0] sm:$0xff] %v634
    %768 = vst [vmem:[#allocation7 + $0x1f8] sm:$0xff] %v635
    %769 = vst [vmem:[#allocation7 + $0x200] sm:$0xff] %v636
    %770 = vst [vmem:[#allocation7 + $0x208] sm:$0xff] %v637
    %771 = vst [vmem:[#allocation7 + $0x210] sm:$0xff] %v638
    %772 = vst [vmem:[#allocation7 + $0x218] sm:$0xff] %v639
    %773 = vst [vmem:[#allocation7 + $0x220] sm:$0xff] %v640
    %774 = vst [vmem:[#allocation7 + $0x228] sm:$0xff] %v641
    %775 = vst [vmem:[#allocation7 + $0x230] sm:$0xff] %v642
    %776 = vst [vmem:[#allocation7 + $0x238] sm:$0xff] %v643
    %777 = vst [vmem:[#allocation7 + $0x240] sm:$0xff] %v644
    %778 = vst [vmem:[#allocation7 + $0x248] sm:$0xff] %v645
    %779 = vst [vmem:[#allocation7 + $0x250] sm:$0xff] %v646
    %780 = vst [vmem:[#allocation7 + $0x258] sm:$0xff] %v647
    %781 = vst [vmem:[#allocation7 + $0x260] sm:$0xff] %v648
    %782 = vst [vmem:[#allocation7 + $0x268] sm:$0xff] %v649
    %783 = vst [vmem:[#allocation7 + $0x270] sm:$0xff] %v650
    %784 = vst [vmem:[#allocation7 + $0x278] sm:$0xff] %v651
    %785 = vst [vmem:[#allocation7 + $0x280] sm:$0xff] %v652
    %786 = vst [vmem:[#allocation7 + $0x288] sm:$0xff] %v653
    %787 = vst [vmem:[#allocation7 + $0x290] sm:$0xff] %v654
    %788 = vst [vmem:[#allocation7 + $0x298] sm:$0xff] %v655
    %789 = vst [vmem:[#allocation7 + $0x2a0] sm:$0xff] %v656
    %790 = vst [vmem:[#allocation7 + $0x2a8] sm:$0xff] %v657
    %791 = vst [vmem:[#allocation7 + $0x2b0] sm:$0xff] %v658
    %792 = vst [vmem:[#allocation7 + $0x2b8] sm:$0xff] %v659
    %793 = vst [vmem:[#allocation7 + $0x2c0] sm:$0xff] %v660
    %794 = vst [vmem:[#allocation7 + $0x2c8] sm:$0xff] %v661
    %795 = vst [vmem:[#allocation7 + $0x2d0] sm:$0xff] %v662
    %796 = vst [vmem:[#allocation7 + $0x2d8] sm:$0xff] %v663
    %797 = vst [vmem:[#allocation7 + $0x2e0] sm:$0xff] %v664
    %798 = vst [vmem:[#allocation7 + $0x2e8] sm:$0xff] %v665
    %799 = vst [vmem:[#allocation7 + $0x2f0] sm:$0xff] %v666
    %800 = vst [vmem:[#allocation7 + $0x2f8] sm:$0xff] %v667
    %801 = vst [vmem:[#allocation7 + $0x300] sm:$0xff] %v668
    %802 = vst [vmem:[#allocation7 + $0x308] sm:$0xff] %v669
    %803 = vst [vmem:[#allocation7 + $0x310] sm:$0xff] %v670
    %804 = vst [vmem:[#allocation7 + $0x318] sm:$0xff] %v671
    %805 = vst [vmem:[#allocation7 + $0x320] sm:$0xff] %v672
    %806 = vst [vmem:[#allocation7 + $0x328] sm:$0xff] %v673
    %807 = vst [vmem:[#allocation7 + $0x330] sm:$0xff] %v674
    %808 = vst [vmem:[#allocation7 + $0x338] sm:$0xff] %v675
    %809 = vst [vmem:[#allocation7 + $0x340] sm:$0xff] %v676
    %810 = vst [vmem:[#allocation7 + $0x348] sm:$0xff] %v677
    %811 = vst [vmem:[#allocation7 + $0x350] sm:$0xff] %v678
    %812 = vst [vmem:[#allocation7 + $0x358] sm:$0xff] %v679
    %813 = vst [vmem:[#allocation7 + $0x360] sm:$0xff] %v680
    %814 = vst [vmem:[#allocation7 + $0x368] sm:$0xff] %v681
    %815 = vst [vmem:[#allocation7 + $0x370] sm:$0xff] %v682
    %816 = vst [vmem:[#allocation7 + $0x378] sm:$0xff] %v683
    %817 = vst [vmem:[#allocation7 + $0x380] sm:$0xff] %v684
    %818 = vst [vmem:[#allocation7 + $0x388] sm:$0xff] %v685
    %819 = vst [vmem:[#allocation7 + $0x390] sm:$0xff] %v686
    %820 = vst [vmem:[#allocation7 + $0x398] sm:$0xff] %v687
    %821 = vst [vmem:[#allocation7 + $0x3a0] sm:$0xff] %v688
    %822 = vst [vmem:[#allocation7 + $0x3a8] sm:$0xff] %v689
    %823 = vst [vmem:[#allocation7 + $0x3b0] sm:$0xff] %v690
    %824 = vst [vmem:[#allocation7 + $0x3b8] sm:$0xff] %v691
    %825 = vst [vmem:[#allocation7 + $0x3c0] sm:$0xff] %v692
    %826 = vst [vmem:[#allocation7 + $0x3c8] sm:$0xff] %v693
    %827 = vst [vmem:[#allocation7 + $0x3d0] sm:$0xff] %v694
    %828 = vst [vmem:[#allocation7 + $0x3d8] sm:$0xff] %v695
    %829 = vst [vmem:[#allocation7 + $0x3e0] sm:$0xff] %v696
    %830 = vst [vmem:[#allocation7 + $0x3e8] sm:$0xff] %v697
    %831 = vst [vmem:[#allocation7 + $0x3f0] sm:$0xff] %v698
    %832 = vst [vmem:[#allocation7 + $0x3f8] sm:$0xff] %v699
    %833 = vst [vmem:[%s8] sm:$0x1] %v704
    %v834 = vld [vmem:[%s0] sm:$0xff]
    %v835 = vld [vmem:[%s0 + $0x8] sm:$0xff]
    %v836 = vld [vmem:[%s0 + $0x10] sm:$0xff]
    %v837 = vld [vmem:[%s0 + $0x18] sm:$0xff]
    %v838 = vld [vmem:[%s0 + $0x20] sm:$0xff]
    %v839 = vld [vmem:[%s0 + $0x28] sm:$0xff]
    %v840 = vld [vmem:[%s0 + $0x30] sm:$0xff]
    %v841 = vld [vmem:[%s0 + $0x38] sm:$0xff]
    %v842 = vld [vmem:[%s1] sm:$0xff]
    %v843 = vld [vmem:[%s1 + $0x8] sm:$0xff]
    %v844 = vld [vmem:[%s1 + $0x10] sm:$0xff]
    %v845 = vld [vmem:[%s1 + $0x18] sm:$0xff]
    %v846 = vld [vmem:[%s1 + $0x20] sm:$0xff]
    %v847 = vld [vmem:[%s1 + $0x28] sm:$0xff]
    %v848 = vld [vmem:[%s1 + $0x30] sm:$0xff]
    %v849 = vld [vmem:[%s1 + $0x38] sm:$0xff]
    %v850 = vpack.c.bf16 %v842, %v834
    %v851 = vpack.c.bf16 %v843, %v835
    %v852 = vpack.c.bf16 %v844, %v836
    %v853 = vpack.c.bf16 %v845, %v837
    %v854 = vpack.c.bf16 %v846, %v838
    %v855 = vpack.c.bf16 %v847, %v839
    %v856 = vpack.c.bf16 %v848, %v840
    %v857 = vpack.c.bf16 %v849, %v841
    %v858 = vld [vmem:[%s2] sm:$0xff]
    %v859 = vld [vmem:[%s2 + $0x8] sm:$0xff]
    %v860 = vld [vmem:[%s2 + $0x10] sm:$0xff]
    %v861 = vld [vmem:[%s2 + $0x18] sm:$0xff]
    %v862 = vld [vmem:[%s2 + $0x20] sm:$0xff]
    %v863 = vld [vmem:[%s2 + $0x28] sm:$0xff]
    %v864 = vld [vmem:[%s2 + $0x30] sm:$0xff]
    %v865 = vld [vmem:[%s2 + $0x38] sm:$0xff]
    %v866 = vld [vmem:[%s2 + $0x40] sm:$0xff]
    %v867 = vld [vmem:[%s2 + $0x48] sm:$0xff]
    %v868 = vld [vmem:[%s2 + $0x50] sm:$0xff]
    %v869 = vld [vmem:[%s2 + $0x58] sm:$0xff]
    %v870 = vld [vmem:[%s2 + $0x60] sm:$0xff]
    %v871 = vld [vmem:[%s2 + $0x68] sm:$0xff]
    %v872 = vld [vmem:[%s2 + $0x70] sm:$0xff]
    %v873 = vld [vmem:[%s2 + $0x78] sm:$0xff]
    %v874 = vld [vmem:[%s2 + $0x80] sm:$0xff]
    %v875 = vld [vmem:[%s2 + $0x88] sm:$0xff]
    %v876 = vld [vmem:[%s2 + $0x90] sm:$0xff]
    %v877 = vld [vmem:[%s2 + $0x98] sm:$0xff]
    %v878 = vld [vmem:[%s2 + $0xa0] sm:$0xff]
    %v879 = vld [vmem:[%s2 + $0xa8] sm:$0xff]
    %v880 = vld [vmem:[%s2 + $0xb0] sm:$0xff]
    %v881 = vld [vmem:[%s2 + $0xb8] sm:$0xff]
    %v882 = vld [vmem:[%s2 + $0xc0] sm:$0xff]
    %v883 = vld [vmem:[%s2 + $0xc8] sm:$0xff]
    %v884 = vld [vmem:[%s2 + $0xd0] sm:$0xff]
    %v885 = vld [vmem:[%s2 + $0xd8] sm:$0xff]
    %v886 = vld [vmem:[%s2 + $0xe0] sm:$0xff]
    %v887 = vld [vmem:[%s2 + $0xe8] sm:$0xff]
    %v888 = vld [vmem:[%s2 + $0xf0] sm:$0xff]
    %v889 = vld [vmem:[%s2 + $0xf8] sm:$0xff]
    %v890 = vld [vmem:[%s2 + $0x100] sm:$0xff]
    %v891 = vld [vmem:[%s2 + $0x108] sm:$0xff]
    %v892 = vld [vmem:[%s2 + $0x110] sm:$0xff]
    %v893 = vld [vmem:[%s2 + $0x118] sm:$0xff]
    %v894 = vld [vmem:[%s2 + $0x120] sm:$0xff]
    %v895 = vld [vmem:[%s2 + $0x128] sm:$0xff]
    %v896 = vld [vmem:[%s2 + $0x130] sm:$0xff]
    %v897 = vld [vmem:[%s2 + $0x138] sm:$0xff]
    %v898 = vld [vmem:[%s2 + $0x140] sm:$0xff]
    %v899 = vld [vmem:[%s2 + $0x148] sm:$0xff]
    %v900 = vld [vmem:[%s2 + $0x150] sm:$0xff]
    %v901 = vld [vmem:[%s2 + $0x158] sm:$0xff]
    %v902 = vld [vmem:[%s2 + $0x160] sm:$0xff]
    %v903 = vld [vmem:[%s2 + $0x168] sm:$0xff]
    %v904 = vld [vmem:[%s2 + $0x170] sm:$0xff]
    %v905 = vld [vmem:[%s2 + $0x178] sm:$0xff]
    %v906 = vld [vmem:[%s2 + $0x180] sm:$0xff]
    %v907 = vld [vmem:[%s2 + $0x188] sm:$0xff]
    %v908 = vld [vmem:[%s2 + $0x190] sm:$0xff]
    %v909 = vld [vmem:[%s2 + $0x198] sm:$0xff]
    %v910 = vld [vmem:[%s2 + $0x1a0] sm:$0xff]
    %v911 = vld [vmem:[%s2 + $0x1a8] sm:$0xff]
    %v912 = vld [vmem:[%s2 + $0x1b0] sm:$0xff]
    %v913 = vld [vmem:[%s2 + $0x1b8] sm:$0xff]
    %v914 = vld [vmem:[%s2 + $0x1c0] sm:$0xff]
    %v915 = vld [vmem:[%s2 + $0x1c8] sm:$0xff]
    %v916 = vld [vmem:[%s2 + $0x1d0] sm:$0xff]
    %v917 = vld [vmem:[%s2 + $0x1d8] sm:$0xff]
    %v918 = vld [vmem:[%s2 + $0x1e0] sm:$0xff]
    %v919 = vld [vmem:[%s2 + $0x1e8] sm:$0xff]
    %v920 = vld [vmem:[%s2 + $0x1f0] sm:$0xff]
    %v921 = vld [vmem:[%s2 + $0x1f8] sm:$0xff]
    %v922 = vld [vmem:[%s2 + $0x200] sm:$0xff]
    %v923 = vld [vmem:[%s2 + $0x208] sm:$0xff]
    %v924 = vld [vmem:[%s2 + $0x210] sm:$0xff]
    %v925 = vld [vmem:[%s2 + $0x218] sm:$0xff]
    %v926 = vld [vmem:[%s2 + $0x220] sm:$0xff]
    %v927 = vld [vmem:[%s2 + $0x228] sm:$0xff]
    %v928 = vld [vmem:[%s2 + $0x230] sm:$0xff]
    %v929 = vld [vmem:[%s2 + $0x238] sm:$0xff]
    %v930 = vld [vmem:[%s2 + $0x240] sm:$0xff]
    %v931 = vld [vmem:[%s2 + $0x248] sm:$0xff]
    %v932 = vld [vmem:[%s2 + $0x250] sm:$0xff]
    %v933 = vld [vmem:[%s2 + $0x258] sm:$0xff]
    %v934 = vld [vmem:[%s2 + $0x260] sm:$0xff]
    %v935 = vld [vmem:[%s2 + $0x268] sm:$0xff]
    %v936 = vld [vmem:[%s2 + $0x270] sm:$0xff]
    %v937 = vld [vmem:[%s2 + $0x278] sm:$0xff]
    %v938 = vld [vmem:[%s2 + $0x280] sm:$0xff]
    %v939 = vld [vmem:[%s2 + $0x288] sm:$0xff]
    %v940 = vld [vmem:[%s2 + $0x290] sm:$0xff]
    %v941 = vld [vmem:[%s2 + $0x298] sm:$0xff]
    %v942 = vld [vmem:[%s2 + $0x2a0] sm:$0xff]
    %v943 = vld [vmem:[%s2 + $0x2a8] sm:$0xff]
    %v944 = vld [vmem:[%s2 + $0x2b0] sm:$0xff]
    %v945 = vld [vmem:[%s2 + $0x2b8] sm:$0xff]
    %v946 = vld [vmem:[%s2 + $0x2c0] sm:$0xff]
    %v947 = vld [vmem:[%s2 + $0x2c8] sm:$0xff]
    %v948 = vld [vmem:[%s2 + $0x2d0] sm:$0xff]
    %v949 = vld [vmem:[%s2 + $0x2d8] sm:$0xff]
    %v950 = vld [vmem:[%s2 + $0x2e0] sm:$0xff]
    %v951 = vld [vmem:[%s2 + $0x2e8] sm:$0xff]
    %v952 = vld [vmem:[%s2 + $0x2f0] sm:$0xff]
    %v953 = vld [vmem:[%s2 + $0x2f8] sm:$0xff]
    %v954 = vld [vmem:[%s2 + $0x300] sm:$0xff]
    %v955 = vld [vmem:[%s2 + $0x308] sm:$0xff]
    %v956 = vld [vmem:[%s2 + $0x310] sm:$0xff]
    %v957 = vld [vmem:[%s2 + $0x318] sm:$0xff]
    %v958 = vld [vmem:[%s2 + $0x320] sm:$0xff]
    %v959 = vld [vmem:[%s2 + $0x328] sm:$0xff]
    %v960 = vld [vmem:[%s2 + $0x330] sm:$0xff]
    %v961 = vld [vmem:[%s2 + $0x338] sm:$0xff]
    %v962 = vld [vmem:[%s2 + $0x340] sm:$0xff]
    %v963 = vld [vmem:[%s2 + $0x348] sm:$0xff]
    %v964 = vld [vmem:[%s2 + $0x350] sm:$0xff]
    %v965 = vld [vmem:[%s2 + $0x358] sm:$0xff]
    %v966 = vld [vmem:[%s2 + $0x360] sm:$0xff]
    %v967 = vld [vmem:[%s2 + $0x368] sm:$0xff]
    %v968 = vld [vmem:[%s2 + $0x370] sm:$0xff]
    %v969 = vld [vmem:[%s2 + $0x378] sm:$0xff]
    %v970 = vld [vmem:[%s2 + $0x380] sm:$0xff]
    %v971 = vld [vmem:[%s2 + $0x388] sm:$0xff]
    %v972 = vld [vmem:[%s2 + $0x390] sm:$0xff]
    %v973 = vld [vmem:[%s2 + $0x398] sm:$0xff]
    %v974 = vld [vmem:[%s2 + $0x3a0] sm:$0xff]
    %v975 = vld [vmem:[%s2 + $0x3a8] sm:$0xff]
    %v976 = vld [vmem:[%s2 + $0x3b0] sm:$0xff]
    %v977 = vld [vmem:[%s2 + $0x3b8] sm:$0xff]
    %v978 = vld [vmem:[%s2 + $0x3c0] sm:$0xff]
    %v979 = vld [vmem:[%s2 + $0x3c8] sm:$0xff]
    %v980 = vld [vmem:[%s2 + $0x3d0] sm:$0xff]
    %v981 = vld [vmem:[%s2 + $0x3d8] sm:$0xff]
    %v982 = vld [vmem:[%s2 + $0x3e0] sm:$0xff]
    %v983 = vld [vmem:[%s2 + $0x3e8] sm:$0xff]
    %v984 = vld [vmem:[%s2 + $0x3f0] sm:$0xff]
    %v985 = vld [vmem:[%s2 + $0x3f8] sm:$0xff]
    %v986 = vpack.c.bf16 %v859, %v858
    %v987 = vpack.c.bf16 %v861, %v860
    %v988 = vpack.c.bf16 %v863, %v862
    %v989 = vpack.c.bf16 %v865, %v864
    %v990 = vpack.c.bf16 %v867, %v866
    %v991 = vpack.c.bf16 %v869, %v868
    %v992 = vpack.c.bf16 %v871, %v870
    %v993 = vpack.c.bf16 %v873, %v872
    %v994 = vpack.c.bf16 %v875, %v874
    %v995 = vpack.c.bf16 %v877, %v876
    %v996 = vpack.c.bf16 %v879, %v878
    %v997 = vpack.c.bf16 %v881, %v880
    %v998 = vpack.c.bf16 %v883, %v882
    %v999 = vpack.c.bf16 %v885, %v884
    %v1000 = vpack.c.bf16 %v887, %v886
    %v1001 = vpack.c.bf16 %v889, %v888
    %v1002 = vpack.c.bf16 %v891, %v890
    %v1003 = vpack.c.bf16 %v893, %v892
    %v1004 = vpack.c.bf16 %v895, %v894
    %v1005 = vpack.c.bf16 %v897, %v896
    %v1006 = vpack.c.bf16 %v899, %v898
    %v1007 = vpack.c.bf16 %v901, %v900
    %v1008 = vpack.c.bf16 %v903, %v902
    %v1009 = vpack.c.bf16 %v905, %v904
    %v1010 = vpack.c.bf16 %v907, %v906
    %v1011 = vpack.c.bf16 %v909, %v908
    %v1012 = vpack.c.bf16 %v911, %v910
    %v1013 = vpack.c.bf16 %v913, %v912
    %v1014 = vpack.c.bf16 %v915, %v914
    %v1015 = vpack.c.bf16 %v917, %v916
    %v1016 = vpack.c.bf16 %v919, %v918
    %v1017 = vpack.c.bf16 %v921, %v920
    %v1018 = vpack.c.bf16 %v923, %v922
    %v1019 = vpack.c.bf16 %v925, %v924
    %v1020 = vpack.c.bf16 %v927, %v926
    %v1021 = vpack.c.bf16 %v929, %v928
    %v1022 = vpack.c.bf16 %v931, %v930
    %v1023 = vpack.c.bf16 %v933, %v932
    %v1024 = vpack.c.bf16 %v935, %v934
    %v1025 = vpack.c.bf16 %v937, %v936
    %v1026 = vpack.c.bf16 %v939, %v938
    %v1027 = vpack.c.bf16 %v941, %v940
    %v1028 = vpack.c.bf16 %v943, %v942
    %v1029 = vpack.c.bf16 %v945, %v944
    %v1030 = vpack.c.bf16 %v947, %v946
    %v1031 = vpack.c.bf16 %v949, %v948
    %v1032 = vpack.c.bf16 %v951, %v950
    %v1033 = vpack.c.bf16 %v953, %v952
    %v1034 = vpack.c.bf16 %v955, %v954
    %v1035 = vpack.c.bf16 %v957, %v956
    %v1036 = vpack.c.bf16 %v959, %v958
    %v1037 = vpack.c.bf16 %v961, %v960
    %v1038 = vpack.c.bf16 %v963, %v962
    %v1039 = vpack.c.bf16 %v965, %v964
    %v1040 = vpack.c.bf16 %v967, %v966
    %v1041 = vpack.c.bf16 %v969, %v968
    %v1042 = vpack.c.bf16 %v971, %v970
    %v1043 = vpack.c.bf16 %v973, %v972
    %v1044 = vpack.c.bf16 %v975, %v974
    %v1045 = vpack.c.bf16 %v977, %v976
    %v1046 = vpack.c.bf16 %v979, %v978
    %v1047 = vpack.c.bf16 %v981, %v980
    %v1048 = vpack.c.bf16 %v983, %v982
    %v1049 = vpack.c.bf16 %v985, %v984
    %v1050 = vpack.c.bf16 %v573, %v572
    %v1051 = vpack.c.bf16 %v575, %v574
    %v1052 = vpack.c.bf16 %v577, %v576
    %v1053 = vpack.c.bf16 %v579, %v578
    %v1054 = vpack.c.bf16 %v581, %v580
    %v1055 = vpack.c.bf16 %v583, %v582
    %v1056 = vpack.c.bf16 %v585, %v584
    %v1057 = vpack.c.bf16 %v587, %v586
    %v1058 = vpack.c.bf16 %v589, %v588
    %v1059 = vpack.c.bf16 %v591, %v590
    %v1060 = vpack.c.bf16 %v593, %v592
    %v1061 = vpack.c.bf16 %v595, %v594
    %v1062 = vpack.c.bf16 %v597, %v596
    %v1063 = vpack.c.bf16 %v599, %v598
    %v1064 = vpack.c.bf16 %v601, %v600
    %v1065 = vpack.c.bf16 %v603, %v602
    %v1066 = vpack.c.bf16 %v605, %v604
    %v1067 = vpack.c.bf16 %v607, %v606
    %v1068 = vpack.c.bf16 %v609, %v608
    %v1069 = vpack.c.bf16 %v611, %v610
    %v1070 = vpack.c.bf16 %v613, %v612
    %v1071 = vpack.c.bf16 %v615, %v614
    %v1072 = vpack.c.bf16 %v617, %v616
    %v1073 = vpack.c.bf16 %v619, %v618
    %v1074 = vpack.c.bf16 %v621, %v620
    %v1075 = vpack.c.bf16 %v623, %v622
    %v1076 = vpack.c.bf16 %v625, %v624
    %v1077 = vpack.c.bf16 %v627, %v626
    %v1078 = vpack.c.bf16 %v629, %v628
    %v1079 = vpack.c.bf16 %v631, %v630
    %v1080 = vpack.c.bf16 %v633, %v632
    %v1081 = vpack.c.bf16 %v635, %v634
    %v1082 = vpack.c.bf16 %v637, %v636
    %v1083 = vpack.c.bf16 %v639, %v638
    %v1084 = vpack.c.bf16 %v641, %v640
    %v1085 = vpack.c.bf16 %v643, %v642
    %v1086 = vpack.c.bf16 %v645, %v644
    %v1087 = vpack.c.bf16 %v647, %v646
    %v1088 = vpack.c.bf16 %v649, %v648
    %v1089 = vpack.c.bf16 %v651, %v650
    %v1090 = vpack.c.bf16 %v653, %v652
    %v1091 = vpack.c.bf16 %v655, %v654
    %v1092 = vpack.c.bf16 %v657, %v656
    %v1093 = vpack.c.bf16 %v659, %v658
    %v1094 = vpack.c.bf16 %v661, %v660
    %v1095 = vpack.c.bf16 %v663, %v662
    %v1096 = vpack.c.bf16 %v665, %v664
    %v1097 = vpack.c.bf16 %v667, %v666
    %v1098 = vpack.c.bf16 %v669, %v668
    %v1099 = vpack.c.bf16 %v671, %v670
    %v1100 = vpack.c.bf16 %v673, %v672
    %v1101 = vpack.c.bf16 %v675, %v674
    %v1102 = vpack.c.bf16 %v677, %v676
    %v1103 = vpack.c.bf16 %v679, %v678
    %v1104 = vpack.c.bf16 %v681, %v680
    %v1105 = vpack.c.bf16 %v683, %v682
    %v1106 = vpack.c.bf16 %v685, %v684
    %v1107 = vpack.c.bf16 %v687, %v686
    %v1108 = vpack.c.bf16 %v689, %v688
    %v1109 = vpack.c.bf16 %v691, %v690
    %v1110 = vpack.c.bf16 %v693, %v692
    %v1111 = vpack.c.bf16 %v695, %v694
    %v1112 = vpack.c.bf16 %v697, %v696
    %v1113 = vpack.c.bf16 %v699, %v698
    %1114 = vmatprep.subr.bf16.mxu0 %v1050
    %1115 = vmatpush1.bf16.msra.mxu0 %v986
    %1116 = vmatprep.subr.bf16.mxu0 %v1051
    %1117 = vmatpush1.bf16.msra.mxu0 %v987
    %1118 = vmatprep.subr.bf16.mxu0 %v1052
    %1119 = vmatpush1.bf16.msra.mxu0 %v988
    %1120 = vmatprep.subr.bf16.mxu0 %v1053
    %1121 = vmatpush1.bf16.msra.mxu0 %v989
    %1122 = vmatprep.subr.bf16.mxu0 %v1054
    %1123 = vmatpush1.bf16.msra.mxu0 %v990
    %1124 = vmatprep.subr.bf16.mxu0 %v1055
    %1125 = vmatpush1.bf16.msra.mxu0 %v991
    %1126 = vmatprep.subr.bf16.mxu0 %v1056
    %1127 = vmatpush1.bf16.msra.mxu0 %v992
    %1128 = vmatprep.subr.bf16.mxu0 %v1057
    %1129 = vmatpush1.bf16.msra.mxu0 %v993
    %1130 = vmatprep.subr.bf16.mxu0 %v1058
    %1131 = vmatpush1.bf16.msra.mxu0 %v994
    %1132 = vmatprep.subr.bf16.mxu0 %v1059
    %1133 = vmatpush1.bf16.msra.mxu0 %v995
    %1134 = vmatprep.subr.bf16.mxu0 %v1060
    %1135 = vmatpush1.bf16.msra.mxu0 %v996
    %1136 = vmatprep.subr.bf16.mxu0 %v1061
    %1137 = vmatpush1.bf16.msra.mxu0 %v997
    %1138 = vmatprep.subr.bf16.mxu0 %v1062
    %1139 = vmatpush1.bf16.msra.mxu0 %v998
    %1140 = vmatprep.subr.bf16.mxu0 %v1063
    %1141 = vmatpush1.bf16.msra.mxu0 %v999
    %1142 = vmatprep.subr.bf16.mxu0 %v1064
    %1143 = vmatpush1.bf16.msra.mxu0 %v1000
    %1144 = vmatprep.subr.bf16.mxu0 %v1065
    %1145 = vmatpush1.bf16.msra.mxu0 %v1001
    %1146 = vmatprep.mubr.bf16.mxu0 %v851
    %1147 = vmatmul.mubr.bf16.gmra.mrb[0].mxu0 %v850
    %v1148 = vpop.f32.mrb[0].mxu0
    %v1149 = vadd.f32 0.0, %v1148
    %v1150 = vpop.f32.mrb[0].mxu0
    %v1151 = vpop.f32.mrb[0].mxu0
    %v1152 = vpop.f32.mrb[0].mxu0
    %v1153 = vadd.f32 0.0, %v1152
    %1154 = vdwg.mxu0
    %1155 = vmatprep.subr.bf16.mxu0 %v1066
    %1156 = vmatpush1.bf16.msra.mxu0 %v1002
    %1157 = vmatprep.subr.bf16.mxu0 %v1067
    %1158 = vmatpush1.bf16.msra.mxu0 %v1003
    %1159 = vmatprep.subr.bf16.mxu0 %v1068
    %1160 = vmatpush1.bf16.msra.mxu0 %v1004
    %1161 = vmatprep.subr.bf16.mxu0 %v1069
    %1162 = vmatpush1.bf16.msra.mxu0 %v1005
    %1163 = vmatprep.subr.bf16.mxu0 %v1070
    %1164 = vmatpush1.bf16.msra.mxu0 %v1006
    %1165 = vmatprep.subr.bf16.mxu0 %v1071
    %1166 = vmatpush1.bf16.msra.mxu0 %v1007
    %1167 = vmatprep.subr.bf16.mxu0 %v1072
    %1168 = vmatpush1.bf16.msra.mxu0 %v1008
    %1169 = vmatprep.subr.bf16.mxu0 %v1073
    %1170 = vmatpush1.bf16.msra.mxu0 %v1009
    %1171 = vmatprep.subr.bf16.mxu0 %v1074
    %1172 = vmatpush1.bf16.msra.mxu0 %v1010
    %1173 = vmatprep.subr.bf16.mxu0 %v1075
    %1174 = vmatpush1.bf16.msra.mxu0 %v1011
    %1175 = vmatprep.subr.bf16.mxu0 %v1076
    %1176 = vmatpush1.bf16.msra.mxu0 %v1012
    %1177 = vmatprep.subr.bf16.mxu0 %v1077
    %1178 = vmatpush1.bf16.msra.mxu0 %v1013
    %1179 = vmatprep.subr.bf16.mxu0 %v1078
    %1180 = vmatpush1.bf16.msra.mxu0 %v1014
    %1181 = vmatprep.subr.bf16.mxu0 %v1079
    %1182 = vmatpush1.bf16.msra.mxu0 %v1015
    %1183 = vmatprep.subr.bf16.mxu0 %v1080
    %1184 = vmatpush1.bf16.msra.mxu0 %v1016
    %1185 = vmatprep.subr.bf16.mxu0 %v1081
    %1186 = vmatpush1.bf16.msra.mxu0 %v1017
    %1187 = vmatprep.mubr.bf16.mxu0 %v853
    %1188 = vmatmul.mubr.bf16.gmra.mrb[0].mxu0 %v852
    %v1189 = vpop.f32.mrb[0].mxu0
    %v1190 = vadd.f32 %v1149, %v1189
    %v1191 = vpop.f32.mrb[0].mxu0
    %v1192 = vpop.f32.mrb[0].mxu0
    %v1193 = vpop.f32.mrb[0].mxu0
    %v1194 = vadd.f32 %v1153, %v1193
    %1195 = vdwg.mxu0
    %1196 = vmatprep.subr.bf16.mxu0 %v1082
    %1197 = vmatpush1.bf16.msra.mxu0 %v1018
    %1198 = vmatprep.subr.bf16.mxu0 %v1083
    %1199 = vmatpush1.bf16.msra.mxu0 %v1019
    %1200 = vmatprep.subr.bf16.mxu0 %v1084
    %1201 = vmatpush1.bf16.msra.mxu0 %v1020
    %1202 = vmatprep.subr.bf16.mxu0 %v1085
    %1203 = vmatpush1.bf16.msra.mxu0 %v1021
    %1204 = vmatprep.subr.bf16.mxu0 %v1086
    %1205 = vmatpush1.bf16.msra.mxu0 %v1022
    %1206 = vmatprep.subr.bf16.mxu0 %v1087
    %1207 = vmatpush1.bf16.msra.mxu0 %v1023
    %1208 = vmatprep.subr.bf16.mxu0 %v1088
    %1209 = vmatpush1.bf16.msra.mxu0 %v1024
    %1210 = vmatprep.subr.bf16.mxu0 %v1089
    %1211 = vmatpush1.bf16.msra.mxu0 %v1025
    %1212 = vmatprep.subr.bf16.mxu0 %v1090
    %1213 = vmatpush1.bf16.msra.mxu0 %v1026
    %1214 = vmatprep.subr.bf16.mxu0 %v1091
    %1215 = vmatpush1.bf16.msra.mxu0 %v1027
    %1216 = vmatprep.subr.bf16.mxu0 %v1092
    %1217 = vmatpush1.bf16.msra.mxu0 %v1028
    %1218 = vmatprep.subr.bf16.mxu0 %v1093
    %1219 = vmatpush1.bf16.msra.mxu0 %v1029
    %1220 = vmatprep.subr.bf16.mxu0 %v1094
    %1221 = vmatpush1.bf16.msra.mxu0 %v1030
    %1222 = vmatprep.subr.bf16.mxu0 %v1095
    %1223 = vmatpush1.bf16.msra.mxu0 %v1031
    %1224 = vmatprep.subr.bf16.mxu0 %v1096
    %1225 = vmatpush1.bf16.msra.mxu0 %v1032
    %1226 = vmatprep.subr.bf16.mxu0 %v1097
    %1227 = vmatpush1.bf16.msra.mxu0 %v1033
    %1228 = vmatprep.mubr.bf16.mxu0 %v855
    %1229 = vmatmul.mubr.bf16.gmra.mrb[0].mxu0 %v854
    %v1230 = vpop.f32.mrb[0].mxu0
    %v1231 = vadd.f32 %v1190, %v1230
    %v1232 = vpop.f32.mrb[0].mxu0
    %v1233 = vpop.f32.mrb[0].mxu0
    %v1234 = vpop.f32.mrb[0].mxu0
    %v1235 = vadd.f32 %v1194, %v1234
    %1236 = vdwg.mxu0
    %1237 = vmatprep.subr.bf16.mxu0 %v1098
    %1238 = vmatpush1.bf16.msra.mxu0 %v1034
    %1239 = vmatprep.subr.bf16.mxu0 %v1099
    %1240 = vmatpush1.bf16.msra.mxu0 %v1035
    %1241 = vmatprep.subr.bf16.mxu0 %v1100
    %1242 = vmatpush1.bf16.msra.mxu0 %v1036
    %1243 = vmatprep.subr.bf16.mxu0 %v1101
    %1244 = vmatpush1.bf16.msra.mxu0 %v1037
    %1245 = vmatprep.subr.bf16.mxu0 %v1102
    %1246 = vmatpush1.bf16.msra.mxu0 %v1038
    %1247 = vmatprep.subr.bf16.mxu0 %v1103
    %1248 = vmatpush1.bf16.msra.mxu0 %v1039
    %1249 = vmatprep.subr.bf16.mxu0 %v1104
    %1250 = vmatpush1.bf16.msra.mxu0 %v1040
    %1251 = vmatprep.subr.bf16.mxu0 %v1105
    %1252 = vmatpush1.bf16.msra.mxu0 %v1041
    %1253 = vmatprep.subr.bf16.mxu0 %v1106
    %1254 = vmatpush1.bf16.msra.mxu0 %v1042
    %1255 = vmatprep.subr.bf16.mxu0 %v1107
    %1256 = vmatpush1.bf16.msra.mxu0 %v1043
    %1257 = vmatprep.subr.bf16.mxu0 %v1108
    %1258 = vmatpush1.bf16.msra.mxu0 %v1044
    %1259 = vmatprep.subr.bf16.mxu0 %v1109
    %1260 = vmatpush1.bf16.msra.mxu0 %v1045
    %1261 = vmatprep.subr.bf16.mxu0 %v1110
    %1262 = vmatpush1.bf16.msra.mxu0 %v1046
    %1263 = vmatprep.subr.bf16.mxu0 %v1111
    %1264 = vmatpush1.bf16.msra.mxu0 %v1047
    %1265 = vmatprep.subr.bf16.mxu0 %v1112
    %1266 = vmatpush1.bf16.msra.mxu0 %v1048
    %1267 = vmatprep.subr.bf16.mxu0 %v1113
    %1268 = vmatpush1.bf16.msra.mxu0 %v1049
    %1269 = vmatprep.mubr.bf16.mxu0 %v857
    %1270 = vmatmul.mubr.bf16.gmra.mrb[0].mxu0 %v856
    %v1271 = vpop.f32.mrb[0].mxu0
    %v1272 = vadd.f32 %v1231, %v1271
    %v1273 = vpop.f32.mrb[0].mxu0
    %v1274 = vpop.f32.mrb[0].mxu0
    %v1275 = vpop.f32.mrb[0].mxu0
    %v1276 = vadd.f32 %v1235, %v1275
    %1277 = vdwg.mxu0
    %v1278 = vld [vmem:[%s3] sm:$0x1]
    %v1280 = vlaneseq
    %v1281 = vshrl.u32 %v1280, 7
    %v1282 = vsub.s32 0, %v1281
    %v1283 = vrot.slane %v1278, %v1282
    %v1285 = vadd.f32 %v1272, %v1283
    %v1287 = vlaneseq
    %v1288 = vshrl.u32 %v1287, 7
    %v1289 = vsub.s32 0, %v1288
    %v1290 = vrot.slane %v704, %v1289
    %v1292 = vadd.f32 %v1276, %v1290
    %v1293 = vmul.f32 %v1285, %v1285
    %1294 = vadd.xlane.f32.xlu0 %v1293
    %v1295 = vpop.xlane.xlu0 %1294
    %v1296 = vmax.f32 %v1295, 1e-24
    %v1297 = vrsqrt.pop %v1296
    %v1298 = vmul.f32 %v1292, %v1292
    %1299 = vadd.xlane.f32.xlu0 %v1298
    %v1300 = vpop.xlane.xlu0 %1299
    %v1301 = vmax.f32 %v1300, 1e-24
    %v1302 = vrsqrt.pop %v1301
    %v1303 = vmul.f32 %v1285, %v1297
    %v1304 = vmul.f32 %v1292, %v1302
    %1305 = vst [vmem:[%s9] sm:$0xff] %v1304
    %v1306 = vmul.f32 %v1303, %v1304
    %1307 = vadd.xlane.f32.xlu0 %v1306
    %v1308 = vpop.xlane.xlu0 %1307
    %v1309 = vmul.f32 %v1308, 10.0
    %1310 = vst [vmem:[%s10] sm:$0xff] %v1309
    %v1311 = vpack.c.bf16 %v1303, %v1303
    %v1312 = vld [vmem:[#allocation5] sm:$0xff]
    %v1313 = vld [vmem:[#allocation5 + $0x8] sm:$0xff]
    %v1314 = vld [vmem:[#allocation5 + $0x10] sm:$0xff]
    %v1315 = vld [vmem:[#allocation5 + $0x18] sm:$0xff]
    %v1316 = vld [vmem:[#allocation5 + $0x20] sm:$0xff]
    %v1317 = vld [vmem:[#allocation5 + $0x28] sm:$0xff]
    %v1318 = vld [vmem:[#allocation5 + $0x30] sm:$0xff]
    %v1319 = vld [vmem:[#allocation5 + $0x38] sm:$0xff]
    %v1320 = vld [vmem:[#allocation5 + $0x40] sm:$0xff]
    %v1321 = vld [vmem:[#allocation5 + $0x48] sm:$0xff]
    %v1322 = vld [vmem:[#allocation5 + $0x50] sm:$0xff]
    %v1323 = vld [vmem:[#allocation5 + $0x58] sm:$0xff]
    %v1324 = vld [vmem:[#allocation5 + $0x60] sm:$0xff]
    %v1325 = vld [vmem:[#allocation5 + $0x68] sm:$0xff]
    %v1326 = vld [vmem:[#allocation5 + $0x70] sm:$0xff]
    %v1327 = vld [vmem:[#allocation5 + $0x78] sm:$0xff]
    %v1328 = vld [vmem:[#allocation5 + $0x80] sm:$0xff]
    %v1329 = vld [vmem:[#allocation5 + $0x88] sm:$0xff]
    %v1330 = vld [vmem:[#allocation5 + $0x90] sm:$0xff]
    %v1331 = vld [vmem:[#allocation5 + $0x98] sm:$0xff]
    %v1332 = vld [vmem:[#allocation5 + $0xa0] sm:$0xff]
    %v1333 = vld [vmem:[#allocation5 + $0xa8] sm:$0xff]
    %v1334 = vld [vmem:[#allocation5 + $0xb0] sm:$0xff]
    %v1335 = vld [vmem:[#allocation5 + $0xb8] sm:$0xff]
    %v1336 = vld [vmem:[#allocation5 + $0xc0] sm:$0xff]
    %v1337 = vld [vmem:[#allocation5 + $0xc8] sm:$0xff]
    %v1338 = vld [vmem:[#allocation5 + $0xd0] sm:$0xff]
    %v1339 = vld [vmem:[#allocation5 + $0xd8] sm:$0xff]
    %v1340 = vld [vmem:[#allocation5 + $0xe0] sm:$0xff]
    %v1341 = vld [vmem:[#allocation5 + $0xe8] sm:$0xff]
    %v1342 = vld [vmem:[#allocation5 + $0xf0] sm:$0xff]
    %v1343 = vld [vmem:[#allocation5 + $0xf8] sm:$0xff]
    %v1344 = vpack.c.bf16 %v1313, %v1312
    %v1345 = vpack.c.bf16 %v1315, %v1314
    %v1346 = vpack.c.bf16 %v1317, %v1316
    %v1347 = vpack.c.bf16 %v1319, %v1318
    %v1348 = vpack.c.bf16 %v1321, %v1320
    %v1349 = vpack.c.bf16 %v1323, %v1322
    %v1350 = vpack.c.bf16 %v1325, %v1324
    %v1351 = vpack.c.bf16 %v1327, %v1326
    %v1352 = vpack.c.bf16 %v1329, %v1328
    %v1353 = vpack.c.bf16 %v1331, %v1330
    %v1354 = vpack.c.bf16 %v1333, %v1332
    %v1355 = vpack.c.bf16 %v1335, %v1334
    %v1356 = vpack.c.bf16 %v1337, %v1336
    %v1357 = vpack.c.bf16 %v1339, %v1338
    %v1358 = vpack.c.bf16 %v1341, %v1340
    %v1359 = vpack.c.bf16 %v1343, %v1342
    %1360 = vmatprep.subr.bf16.mxu0 0
    %1361 = vmatpush1.bf16.xpose.msra.mxu0 %v1344
    %1362 = vmatprep.subr.bf16.mxu0 0
    %1363 = vmatpush1.bf16.xpose.msra.mxu0 %v1345
    %1364 = vmatprep.subr.bf16.mxu0 0
    %1365 = vmatpush1.bf16.xpose.msra.mxu0 %v1346
    %1366 = vmatprep.subr.bf16.mxu0 0
    %1367 = vmatpush1.bf16.xpose.msra.mxu0 %v1347
    %1368 = vmatprep.subr.bf16.mxu0 0
    %1369 = vmatpush1.bf16.xpose.msra.mxu0 %v1348
    %1370 = vmatprep.subr.bf16.mxu0 0
    %1371 = vmatpush1.bf16.xpose.msra.mxu0 %v1349
    %1372 = vmatprep.subr.bf16.mxu0 0
    %1373 = vmatpush1.bf16.xpose.msra.mxu0 %v1350
    %1374 = vmatprep.subr.bf16.mxu0 0
    %1375 = vmatpush1.bf16.xpose.msra.mxu0 %v1351
    %1376 = vmatprep.subr.bf16.mxu0 0
    %1377 = vmatpush1.bf16.xpose.msra.mxu0 %v1352
    %1378 = vmatprep.subr.bf16.mxu0 0
    %1379 = vmatpush1.bf16.xpose.msra.mxu0 %v1353
    %1380 = vmatprep.subr.bf16.mxu0 0
    %1381 = vmatpush1.bf16.xpose.msra.mxu0 %v1354
    %1382 = vmatprep.subr.bf16.mxu0 0
    %1383 = vmatpush1.bf16.xpose.msra.mxu0 %v1355
    %1384 = vmatprep.subr.bf16.mxu0 0
    %1385 = vmatpush1.bf16.xpose.msra.mxu0 %v1356
    %1386 = vmatprep.subr.bf16.mxu0 0
    %1387 = vmatpush1.bf16.xpose.msra.mxu0 %v1357
    %1388 = vmatprep.subr.bf16.mxu0 0
    %1389 = vmatpush1.bf16.xpose.msra.mxu0 %v1358
    %1390 = vmatprep.subr.bf16.mxu0 0
    %1391 = vmatpush1.bf16.xpose.msra.mxu0 %v1359
    %1392 = vmatprep.mubr.bf16.mxu0 0
    %1393 = vmatmul.mubr.bf16.gmra.mrb[0].mxu0 %v1311
    %v1394 = vpop.f32.mrb[0].mxu0
    %v1395 = vadd.f32 0.0, %v1394
    %v1396 = vpop.f32.mrb[0].mxu0
    %v1397 = vadd.f32 0.0, %v1396
    %v1398 = vpop.f32.mrb[0].mxu0
    %v1399 = vpop.f32.mrb[0].mxu0
    %1400 = vdwg.mxu0
    %v1401 = vmul.f32 %v1395, 10.0
    %v1402 = vmul.f32 %v1397, 10.0
    %1403 = vst [vmem:[%s10 + $0x8] sm:$0xff] %v1401
    %1404 = vst [vmem:[%s10 + $0x10] sm:$0xff] %v1402
    // Predicated region
    $region38: #{moco_forward.1} parent=1 // pred_check
      _
    $region39: #{moco_forward.1} parent=1 // pred_check_branch
      %1406 = sbr.rel (0) target = $region41
    $region40: #{moco_forward.1} parent=1 // pred_region
      %s1408 = ssub.s32 16384, 16384
      %1409 = vsyncadd [#allocation4], %s1408
      %s1410 = sshll.u32 [#allocation7], 4
      %s1411 = int_to_ptr.vmem [resolvable:$true] %s1410
      %1416 = dma.vmem_to_hbm [thread:$0]  %s1411, 16384, %s7, [#allocation4], 128, 128, 8
    $region41: #{moco_forward.1} parent=1 // pred_fallthru
      _
    // Predicated region
    $region42: #{moco_forward.1} parent=1 // pred_check
      _
    $region43: #{moco_forward.1} parent=1 // pred_check_branch
      %1418 = sbr.rel (0) target = $region45
    $region44: #{moco_forward.1} parent=1 // pred_region
      _
    $region45: #{moco_forward.1} parent=1 // pred_fallthru
      _
    // Predicated region
    $region46: #{moco_forward.1} parent=1 // pred_check
      _
    $region47: #{moco_forward.1} parent=1 // pred_check_branch
      %1420 = sbr.rel (0) target = $region49
    $region48: #{moco_forward.1} parent=1 // pred_region
      _
    $region49: #{moco_forward.1} parent=1 // pred_fallthru
      _
    // Predicated region
    $region50: #{moco_forward.1} parent=1 // pred_check
      _
    $region51: #{moco_forward.1} parent=1 // pred_check_branch
      %1422 = sbr.rel (0) target = $region53
    $region52: #{moco_forward.1} parent=1 // pred_region
      _
    $region53: #{moco_forward.1} parent=1 // pred_fallthru
      _
    // Predicated region
    $region54: #{moco_forward.1} parent=1 // pred_check
      _
    $region55: #{moco_forward.1} parent=1 // pred_check_branch
      %1424 = sbr.rel (0) target = $region57
    $region56: #{moco_forward.1} parent=1 // pred_region
      %1425 = dma.done [#allocation4], 16384
    $region57: #{moco_forward.1} parent=1 // pred_fallthru
      _
    // Predicated region
    $region58: #{moco_forward.1} parent=1 // pred_check
      _
    $region59: #{moco_forward.1} parent=1 // pred_check_branch
      %1427 = sbr.rel (0) target = $region61
    $region60: #{moco_forward.1} parent=1 // pred_region
      _
    $region61: #{moco_forward.1} parent=1 // pred_fallthru
      _
    // Predicated region
    $region62: #{moco_forward.1} parent=1 // pred_check
      _
    $region63: #{moco_forward.1} parent=1 // pred_check_branch
      %1429 = sbr.rel (0) target = $region65
    $region64: #{moco_forward.1} parent=1 // pred_region
      _
    $region65: #{moco_forward.1} parent=1 // pred_fallthru
      _
    // Predicated region
    $region66: #{moco_forward.1} parent=1 // pred_check
      _
    $region67: #{moco_forward.1} parent=1 // pred_check_branch
      %1431 = sbr.rel (0) target = $region69
    $region68: #{moco_forward.1} parent=1 // pred_region
      _
    $region69: #{moco_forward.1} parent=1 // pred_fallthru
      _
    %1432 = vsyncpa [#allocation3], 1
    %1433 = vsyncpa [#allocation6], 1
    %1434 = vsyncpa [#allocation4], 1

</llo_original>
